<compile_context>
chip_gen: v7x
topology: tpu7x:2x2x1
jax: 0.10.0
libtpu: 0.0.40
codegen_flags: <defaults>
</compile_context>

<pallas_src>
import jax
import jax.numpy as jnp
from jax import lax
from jax.experimental import pallas as pl
from jax.experimental.pallas import tpu as pltpu


# Packed-weight row offsets (all multiples of 8 => aligned sublane slices).
W1_OFF, W2_OFF, W3_OFF, FW1_OFF = 0, 72, 216, 504          # 72=9*8, 144, 288, 64 rows
B1_ROW, B2_ROW, B3_ROW, FB1_ROW, FW2_ROW, FB2_ROW = 0, 1, 2, 3, 4, 5
C1, C2, C3 = 16, 32, 64


# ------------------------------ Pallas kernel ------------------------------ #

def net6_kernel(x_ref, w_ref, c_ref, o_ref, xp1, xp2, xp3):
    B = x_ref.shape[0]

    def conv3x3_relu(xp, hout, cin, cout, w_off, b_row):
        """SAME 3x3 conv as one im2col MXU matmul + bias + ReLU.
        xp: zero-padded scratch (B, hout+2, 10, cin); only the hout valid output
        rows are formed.  Output (B, hout, 8, cout); W columns beyond the valid
        region hold garbage that is never read downstream."""
        cols = [xp[:, kh:kh + hout, kw:kw + 8, :]
                for kh in range(3) for kw in range(3)]          # 9 x (B,hout,8,cin)
        patches = jnp.concatenate(cols, axis=-1)                # (B,hout,8,9*cin) lane concat
        patches = patches.reshape(B * hout * 8, 9 * cin)        # layout-preserving
        w = w_ref[w_off:w_off + 9 * cin, 0:cout]                # aligned sublane slice
        b = c_ref[b_row:b_row + 1, 0:cout]
        y = jnp.dot(patches, w, preferred_element_type=jnp.float32)   # MXU
        y = jnp.maximum(y + b, 0.0)
        return y.reshape(B, hout, 8, cout)                      # layout-preserving

    def pool2x2_into(ys, dst):
        """2x2 max pool of the valid (H x H) region of ys (B,H,8,C); write the
        (B,H/2,H/2,C) result into dst's interior [1:,1:] (dst pre-zeroed)."""
        Hv = ys.shape[1]
        Ho = Hv // 2
        ya = ys.reshape(B, Ho, 2, 8, ys.shape[-1])      # split leading dim only
        yh = jnp.maximum(ya[:, :, 0], ya[:, :, 1])      # (B,Ho,8,C): H-pairs done
        dst[...] = jnp.zeros_like(dst)
        for wo in range(Ho):                            # W-pairs, one store per col
            m = jnp.maximum(yh[:, :, 2 * wo:2 * wo + 1, :],
                            yh[:, :, 2 * wo + 1:2 * wo + 2, :])   # (B,Ho,1,C)
            dst[:, 1:1 + Ho, 1 + wo:2 + wo, :] = m

    # -- stage input: zero halo + free channel pad 7 -> 8 via zeroed scratch --
    xp1[...] = jnp.zeros_like(xp1)
    xp1[:, 1:9, 1:9, 0:x_ref.shape[-1]] = x_ref[...]

    # -- layer 1: 7 -> 16, 8x8 -> 4x4 ----------------------------------------
    y1 = conv3x3_relu(xp1, 8, 8, C1, W1_OFF, B1_ROW)
    pool2x2_into(y1, xp2)

    # -- layer 2: 16 -> 32, 4x4 -> 2x2 (only the 4 valid output rows formed) --
    y2 = conv3x3_relu(xp2, 4, C1, C2, W2_OFF, B2_ROW)
    pool2x2_into(y2, xp3)

    # -- layer 3: 32 -> 64, 2x2 -> 1x1 (only the 2 valid output rows formed) --
    y3 = conv3x3_relu(xp3, 2, C2, C3, W3_OFF, B3_ROW)

    # -- final 2x2 pool + flatten, vectorized over batch ----------------------
    t = jnp.maximum(y3[:, 0, 0:2, :], y3[:, 1, 0:2, :])   # (B, 2, 64): H-pair max
    fc_in = jnp.max(t, axis=1)                            # (B, 64): W-pair max (sublane reduce)

    # -- fc head: fc1 on the MXU, fc2 as VPU mul + lane reduce (N = 1) --------
    fw1 = w_ref[FW1_OFF:FW1_OFF + 64, 0:32]
    fb1 = c_ref[FB1_ROW:FB1_ROW + 1, 0:32]
    fw2t = c_ref[FW2_ROW:FW2_ROW + 1, 0:32]
    fb2 = c_ref[FB2_ROW:FB2_ROW + 1, 0:1]
    h = jnp.dot(fc_in, fw1, preferred_element_type=jnp.float32)
    h = jnp.maximum(h + fb1, 0.0)                         # (B, 32)
    o_ref[...] = jnp.sum(h * fw2t, axis=-1, keepdims=True) + fb2   # (B, 1)


# ------------------------------ JAX-side glue ------------------------------ #

def prep_params(params):
    """One-time (init-time) packing of every parameter into two VMEM-friendly
    slabs: wpack (568, 64) and bpack (8, 64).  Not part of the hot path."""
    def pad_lanes(a, n=64):
        return jnp.pad(a.astype(jnp.float32), ((0, 0), (0, n - a.shape[1])))

    w1 = jnp.pad(params["w1"], ((0, 0), (0, 0), (0, 1), (0, 0)))   # Cin 7 -> 8
    w1 = w1.reshape(9 * 8, C1)                                     # (72, 16)
    w2 = params["w2"].reshape(9 * C1, C2)                          # (144, 32)
    w3 = params["w3"].reshape(9 * C2, C3)                          # (288, 64)
    fw1 = params["fw1"]                                            # (64, 32)
    wpack = jnp.concatenate(
        [pad_lanes(w1), pad_lanes(w2), pad_lanes(w3), pad_lanes(fw1)], axis=0)  # (568, 64)

    def row64(v):
        v = jnp.asarray(v, jnp.float32).reshape(-1)
        return jnp.pad(v, (0, 64 - v.shape[0]))[None, :]

    bpack = jnp.concatenate(
        [row64(params["b1"]), row64(params["b2"]), row64(params["b3"]),
         row64(params["fb1"]), row64(params["fw2"].reshape(-1)), row64(params["fb2"]),
         jnp.zeros((2, 64), jnp.float32)], axis=0)                 # (8, 64)
    return wpack, bpack


@jax.jit
def net6_forward(x_nchw, wpack, bpack):
    B, C, H, W = x_nchw.shape
    assert (C, H, W) == (7, 8, 8), "Net6 requires 7x8x8 inputs (fc1 in=64)"
    x = jnp.transpose(x_nchw, (0, 2, 3, 1))            # NCHW -> NHWC (B, 8, 8, 7)
    vmem = pl.BlockSpec(memory_space=pltpu.MemorySpace.VMEM)
    return pl.pallas_call(
        net6_kernel,
        out_shape=jax.ShapeDtypeStruct((B, 1), jnp.float32),
        in_specs=[vmem, vmem, vmem],
        out_specs=vmem,
        scratch_shapes=[
            pltpu.VMEM((B, 10, 10, 8), jnp.float32),    # padded input (C 7->8)
            pltpu.VMEM((B, 6, 10, 16), jnp.float32),    # padded layer-1 output (rows read only)
            pltpu.VMEM((B, 4, 10, 32), jnp.float32),    # padded layer-2 output (rows read only)
        ],
    )(x, wpack, bpack)


# --------------------------- reference & params ----------------------------- #

def ref_forward(x_nchw, params):
    x = jnp.transpose(x_nchw, (0, 2, 3, 1))
    for wk, bk in (("w1", "b1"), ("w2", "b2"), ("w3", "b3")):
        x = lax.conv_general_dilated(x, params[wk], (1, 1), "SAME",
                                     dimension_numbers=("NHWC", "HWIO", "NHWC"))
        x = jnp.maximum(x + params[bk], 0.0)
        x = lax.reduce_window(x, -jnp.inf, lax.max,
                              (1, 2, 2, 1), (1, 2, 2, 1), "VALID")
    x = x.reshape(x.shape[0], -1)
    x = jnp.maximum(x @ params["fw1"] + params["fb1"], 0.0)
    return x @ params["fw2"] + params["fb2"]


def init_params(key):
    ks = jax.random.split(key, 10)

    def n(k, shape, scale=0.1):
        return (scale * jax.random.normal(k, shape)).astype(jnp.float32)

    return {
        # conv weights stored HWIO: (kh, kw, Cin, Cout)
        "w1": n(ks[0], (3, 3, 7, 16)),  "b1": n(ks[1], (16,)),
        "w2": n(ks[2], (3, 3, 16, 32)), "b2": n(ks[3], (32,)),
        "w3": n(ks[4], (3, 3, 32, 64)), "b3": n(ks[5], (64,)),
        "fw1": n(ks[6], (64, 32)),      "fb1": n(ks[7], (32,)),
        "fw2": n(ks[8], (32, 1)),       "fb2": n(ks[9], (1,)),
    }


if __name__ == "__main__":
    key = jax.random.PRNGKey(0)
    kx, kp = jax.random.split(key)
    # Three 2x2 pools feeding a 64-wide fc1 imply 8x8 spatial; Conv2d(7, ...) => 7 channels.
    x = jax.random.normal(kx, (2, 7, 8, 8), dtype=jnp.float32)   # NCHW, like PyTorch
    params = init_params(kp)
    wpack, bpack = prep_params(params)        # packed ONCE, outside the hot path

    out = jax.block_until_ready(net6_forward(x, wpack, bpack))

    ref = ref_forward(x, params)
    assert out.shape == (2, 1)
    assert jnp.allclose(out, ref, atol=1e-4, rtol=1e-4), (out, ref)
    print("KERNEL_OK")
</pallas_src>

<mosaic_0001>
module attributes {stable_mosaic.version = 11 : i64} {
  func.func @net6_kernel(%arg0: memref<2x8x8x7xf32, #tpu.memory_space<vmem>>, %arg1: memref<568x64xf32, #tpu.memory_space<vmem>>, %arg2: memref<8x64xf32, #tpu.memory_space<vmem>>, %arg3: memref<2x1xf32, #tpu.memory_space<vmem>>, %arg4: memref<2x10x10x8xf32, #tpu.memory_space<vmem>>, %arg5: memref<2x6x10x16xf32, #tpu.memory_space<vmem>>, %arg6: memref<2x4x10x32xf32, #tpu.memory_space<vmem>>) attributes {dimension_semantics = [], scalar_prefetch = 0 : i64, scratch_operands = 3 : i64, tpu.core_type = #tpu.core_type<tc>} {
    %cst = arith.constant 0.000000e+00 : f32
    %0 = vector.broadcast %cst : f32 to vector<2x10x10x8xf32>
    %c0 = arith.constant 0 : index
    %c0_0 = arith.constant 0 : index
    %c0_1 = arith.constant 0 : index
    %c0_2 = arith.constant 0 : index
    %1 = vector.load %arg4[%c0, %c0_0, %c0_1, %c0_2] : memref<2x10x10x8xf32, #tpu.memory_space<vmem>>, vector<2x10x10x8xf32>
    tpu.vector_store %arg4[%c0, %c0_0, %c0_1, %c0_2], %0 {strides = array<i32>} : memref<2x10x10x8xf32, #tpu.memory_space<vmem>>, vector<2x10x10x8xf32>,
    %c0_3 = arith.constant 0 : index
    %c0_4 = arith.constant 0 : index
    %c0_5 = arith.constant 0 : index
    %c0_6 = arith.constant 0 : index
    %2 = vector.load %arg0[%c0_3, %c0_4, %c0_5, %c0_6] : memref<2x8x8x7xf32, #tpu.memory_space<vmem>>, vector<2x8x8x7xf32>
    %c0_7 = arith.constant 0 : index
    %c1 = arith.constant 1 : index
    %c1_8 = arith.constant 1 : index
    %c0_9 = arith.constant 0 : index
    %3 = vector.load %arg4[%c0_7, %c1, %c1_8, %c0_9] : memref<2x10x10x8xf32, #tpu.memory_space<vmem>>, vector<2x8x8x7xf32>
    tpu.vector_store %arg4[%c0_7, %c1, %c1_8, %c0_9], %2 {strides = array<i32>} : memref<2x10x10x8xf32, #tpu.memory_space<vmem>>, vector<2x8x8x7xf32>,
    %c0_10 = arith.constant 0 : index
    %c0_11 = arith.constant 0 : index
    %c0_12 = arith.constant 0 : index
    %c0_13 = arith.constant 0 : index
    %4 = vector.load %arg4[%c0_10, %c0_11, %c0_12, %c0_13] : memref<2x10x10x8xf32, #tpu.memory_space<vmem>>, vector<2x8x8x8xf32>
    %c0_14 = arith.constant 0 : index
    %c0_15 = arith.constant 0 : index
    %c1_16 = arith.constant 1 : index
    %c0_17 = arith.constant 0 : index
    %5 = vector.load %arg4[%c0_14, %c0_15, %c1_16, %c0_17] : memref<2x10x10x8xf32, #tpu.memory_space<vmem>>, vector<2x8x8x8xf32>
    %c0_18 = arith.constant 0 : index
    %c0_19 = arith.constant 0 : index
    %c2 = arith.constant 2 : index
    %c0_20 = arith.constant 0 : index
    %6 = vector.load %arg4[%c0_18, %c0_19, %c2, %c0_20] : memref<2x10x10x8xf32, #tpu.memory_space<vmem>>, vector<2x8x8x8xf32>
    %c0_21 = arith.constant 0 : index
    %c1_22 = arith.constant 1 : index
    %c0_23 = arith.constant 0 : index
    %c0_24 = arith.constant 0 : index
    %7 = vector.load %arg4[%c0_21, %c1_22, %c0_23, %c0_24] : memref<2x10x10x8xf32, #tpu.memory_space<vmem>>, vector<2x8x8x8xf32>
    %c0_25 = arith.constant 0 : index
    %c1_26 = arith.constant 1 : index
    %c1_27 = arith.constant 1 : index
    %c0_28 = arith.constant 0 : index
    %8 = vector.load %arg4[%c0_25, %c1_26, %c1_27, %c0_28] : memref<2x10x10x8xf32, #tpu.memory_space<vmem>>, vector<2x8x8x8xf32>
    %c0_29 = arith.constant 0 : index
    %c1_30 = arith.constant 1 : index
    %c2_31 = arith.constant 2 : index
    %c0_32 = arith.constant 0 : index
    %9 = vector.load %arg4[%c0_29, %c1_30, %c2_31, %c0_32] : memref<2x10x10x8xf32, #tpu.memory_space<vmem>>, vector<2x8x8x8xf32>
    %c0_33 = arith.constant 0 : index
    %c2_34 = arith.constant 2 : index
    %c0_35 = arith.constant 0 : index
    %c0_36 = arith.constant 0 : index
    %10 = vector.load %arg4[%c0_33, %c2_34, %c0_35, %c0_36] : memref<2x10x10x8xf32, #tpu.memory_space<vmem>>, vector<2x8x8x8xf32>
    %c0_37 = arith.constant 0 : index
    %c2_38 = arith.constant 2 : index
    %c1_39 = arith.constant 1 : index
    %c0_40 = arith.constant 0 : index
    %11 = vector.load %arg4[%c0_37, %c2_38, %c1_39, %c0_40] : memref<2x10x10x8xf32, #tpu.memory_space<vmem>>, vector<2x8x8x8xf32>
    %c0_41 = arith.constant 0 : index
    %c2_42 = arith.constant 2 : index
    %c2_43 = arith.constant 2 : index
    %c0_44 = arith.constant 0 : index
    %12 = vector.load %arg4[%c0_41, %c2_42, %c2_43, %c0_44] : memref<2x10x10x8xf32, #tpu.memory_space<vmem>>, vector<2x8x8x8xf32>
    %13 = tpu.concatenate %4, %5, %6, %7, %8, %9, %10, %11, %12 in 3 : vector<2x8x8x8xf32>, vector<2x8x8x8xf32>, vector<2x8x8x8xf32>, vector<2x8x8x8xf32>, vector<2x8x8x8xf32>, vector<2x8x8x8xf32>, vector<2x8x8x8xf32>, vector<2x8x8x8xf32>, vector<2x8x8x8xf32> -> vector<2x8x8x72xf32>
    %14 = vector.shape_cast %13 : vector<2x8x8x72xf32> to vector<128x72xf32>
    %c0_45 = arith.constant 0 : index
    %c0_46 = arith.constant 0 : index
    %15 = vector.load %arg1[%c0_45, %c0_46] : memref<568x64xf32, #tpu.memory_space<vmem>>, vector<72x16xf32>
    %c0_47 = arith.constant 0 : index
    %c0_48 = arith.constant 0 : index
    %16 = vector.load %arg2[%c0_47, %c0_48] : memref<8x64xf32, #tpu.memory_space<vmem>>, vector<1x16xf32>
    %cst_49 = arith.constant dense<0.000000e+00> : vector<128x16xf32>
    %17 = tpu.matmul %14, %15, %cst_49 {dimension_numbers = #tpu.dot_dimension_numbers<[1], [0], [0], [1], [0, 0, 1, 1], [], []>} : vector<128x72xf32>, vector<72x16xf32>, vector<128x16xf32> -> vector<128x16xf32>
    %18 = vector.broadcast %16 : vector<1x16xf32> to vector<128x16xf32>
    %19 = arith.addf %17, %18 : vector<128x16xf32>
    %cst_50 = arith.constant 0.000000e+00 : f32
    %20 = vector.broadcast %cst_50 : f32 to vector<128x16xf32>
    %21 = arith.maximumf %19, %20 : vector<128x16xf32>
    %22 = vector.shape_cast %21 : vector<128x16xf32> to vector<2x8x8x16xf32>
    %23 = vector.shape_cast %22 : vector<2x8x8x16xf32> to vector<2x4x2x8x16xf32>
    %24 = vector.extract_strided_slice %23 {offsets = [0, 0, 0, 0, 0], sizes = [2, 4, 1, 8, 16], strides = [1, 1, 1, 1, 1]} : vector<2x4x2x8x16xf32> to vector<2x4x1x8x16xf32>
    %25 = vector.shape_cast %24 : vector<2x4x1x8x16xf32> to vector<2x4x8x16xf32>
    %26 = vector.extract_strided_slice %23 {offsets = [0, 0, 1, 0, 0], sizes = [2, 4, 1, 8, 16], strides = [1, 1, 1, 1, 1]} : vector<2x4x2x8x16xf32> to vector<2x4x1x8x16xf32>
    %27 = vector.shape_cast %26 : vector<2x4x1x8x16xf32> to vector<2x4x8x16xf32>
    %28 = arith.maximumf %25, %27 : vector<2x4x8x16xf32>
    %cst_51 = arith.constant 0.000000e+00 : f32
    %29 = vector.broadcast %cst_51 : f32 to vector<2x6x10x16xf32>
    %c0_52 = arith.constant 0 : index
    %c0_53 = arith.constant 0 : index
    %c0_54 = arith.constant 0 : index
    %c0_55 = arith.constant 0 : index
    %30 = vector.load %arg5[%c0_52, %c0_53, %c0_54, %c0_55] : memref<2x6x10x16xf32, #tpu.memory_space<vmem>>, vector<2x6x10x16xf32>
    tpu.vector_store %arg5[%c0_52, %c0_53, %c0_54, %c0_55], %29 {strides = array<i32>} : memref<2x6x10x16xf32, #tpu.memory_space<vmem>>, vector<2x6x10x16xf32>,
    %31 = vector.extract_strided_slice %28 {offsets = [0, 0, 0, 0], sizes = [2, 4, 1, 16], strides = [1, 1, 1, 1]} : vector<2x4x8x16xf32> to vector<2x4x1x16xf32>
    %32 = vector.extract_strided_slice %28 {offsets = [0, 0, 1, 0], sizes = [2, 4, 1, 16], strides = [1, 1, 1, 1]} : vector<2x4x8x16xf32> to vector<2x4x1x16xf32>
    %33 = arith.maximumf %31, %32 : vector<2x4x1x16xf32>
    %c0_56 = arith.constant 0 : index
    %c1_57 = arith.constant 1 : index
    %c1_58 = arith.constant 1 : index
    %c0_59 = arith.constant 0 : index
    %34 = vector.load %arg5[%c0_56, %c1_57, %c1_58, %c0_59] : memref<2x6x10x16xf32, #tpu.memory_space<vmem>>, vector<2x4x1x16xf32>
    tpu.vector_store %arg5[%c0_56, %c1_57, %c1_58, %c0_59], %33 {strides = array<i32>} : memref<2x6x10x16xf32, #tpu.memory_space<vmem>>, vector<2x4x1x16xf32>,
    %35 = vector.extract_strided_slice %28 {offsets = [0, 0, 2, 0], sizes = [2, 4, 1, 16], strides = [1, 1, 1, 1]} : vector<2x4x8x16xf32> to vector<2x4x1x16xf32>
    %36 = vector.extract_strided_slice %28 {offsets = [0, 0, 3, 0], sizes = [2, 4, 1, 16], strides = [1, 1, 1, 1]} : vector<2x4x8x16xf32> to vector<2x4x1x16xf32>
    %37 = arith.maximumf %35, %36 : vector<2x4x1x16xf32>
    %c0_60 = arith.constant 0 : index
    %c1_61 = arith.constant 1 : index
    %c2_62 = arith.constant 2 : index
    %c0_63 = arith.constant 0 : index
    %38 = vector.load %arg5[%c0_60, %c1_61, %c2_62, %c0_63] : memref<2x6x10x16xf32, #tpu.memory_space<vmem>>, vector<2x4x1x16xf32>
    tpu.vector_store %arg5[%c0_60, %c1_61, %c2_62, %c0_63], %37 {strides = array<i32>} : memref<2x6x10x16xf32, #tpu.memory_space<vmem>>, vector<2x4x1x16xf32>,
    %39 = vector.extract_strided_slice %28 {offsets = [0, 0, 4, 0], sizes = [2, 4, 1, 16], strides = [1, 1, 1, 1]} : vector<2x4x8x16xf32> to vector<2x4x1x16xf32>
    %40 = vector.extract_strided_slice %28 {offsets = [0, 0, 5, 0], sizes = [2, 4, 1, 16], strides = [1, 1, 1, 1]} : vector<2x4x8x16xf32> to vector<2x4x1x16xf32>
    %41 = arith.maximumf %39, %40 : vector<2x4x1x16xf32>
    %c0_64 = arith.constant 0 : index
    %c1_65 = arith.constant 1 : index
    %c3 = arith.constant 3 : index
    %c0_66 = arith.constant 0 : index
    %42 = vector.load %arg5[%c0_64, %c1_65, %c3, %c0_66] : memref<2x6x10x16xf32, #tpu.memory_space<vmem>>, vector<2x4x1x16xf32>
    tpu.vector_store %arg5[%c0_64, %c1_65, %c3, %c0_66], %41 {strides = array<i32>} : memref<2x6x10x16xf32, #tpu.memory_space<vmem>>, vector<2x4x1x16xf32>,
    %43 = vector.extract_strided_slice %28 {offsets = [0, 0, 6, 0], sizes = [2, 4, 1, 16], strides = [1, 1, 1, 1]} : vector<2x4x8x16xf32> to vector<2x4x1x16xf32>
    %44 = vector.extract_strided_slice %28 {offsets = [0, 0, 7, 0], sizes = [2, 4, 1, 16], strides = [1, 1, 1, 1]} : vector<2x4x8x16xf32> to vector<2x4x1x16xf32>
    %45 = arith.maximumf %43, %44 : vector<2x4x1x16xf32>
    %c0_67 = arith.constant 0 : index
    %c1_68 = arith.constant 1 : index
    %c4 = arith.constant 4 : index
    %c0_69 = arith.constant 0 : index
    %46 = vector.load %arg5[%c0_67, %c1_68, %c4, %c0_69] : memref<2x6x10x16xf32, #tpu.memory_space<vmem>>, vector<2x4x1x16xf32>
    tpu.vector_store %arg5[%c0_67, %c1_68, %c4, %c0_69], %45 {strides = array<i32>} : memref<2x6x10x16xf32, #tpu.memory_space<vmem>>, vector<2x4x1x16xf32>,
    %c0_70 = arith.constant 0 : index
    %c0_71 = arith.constant 0 : index
    %c0_72 = arith.constant 0 : index
    %c0_73 = arith.constant 0 : index
    %47 = vector.load %arg5[%c0_70, %c0_71, %c0_72, %c0_73] : memref<2x6x10x16xf32, #tpu.memory_space<vmem>>, vector<2x4x8x16xf32>
    %c0_74 = arith.constant 0 : index
    %c0_75 = arith.constant 0 : index
    %c1_76 = arith.constant 1 : index
    %c0_77 = arith.constant 0 : index
    %48 = vector.load %arg5[%c0_74, %c0_75, %c1_76, %c0_77] : memref<2x6x10x16xf32, #tpu.memory_space<vmem>>, vector<2x4x8x16xf32>
    %c0_78 = arith.constant 0 : index
    %c0_79 = arith.constant 0 : index
    %c2_80 = arith.constant 2 : index
    %c0_81 = arith.constant 0 : index
    %49 = vector.load %arg5[%c0_78, %c0_79, %c2_80, %c0_81] : memref<2x6x10x16xf32, #tpu.memory_space<vmem>>, vector<2x4x8x16xf32>
    %c0_82 = arith.constant 0 : index
    %c1_83 = arith.constant 1 : index
    %c0_84 = arith.constant 0 : index
    %c0_85 = arith.constant 0 : index
    %50 = vector.load %arg5[%c0_82, %c1_83, %c0_84, %c0_85] : memref<2x6x10x16xf32, #tpu.memory_space<vmem>>, vector<2x4x8x16xf32>
    %c0_86 = arith.constant 0 : index
    %c1_87 = arith.constant 1 : index
    %c1_88 = arith.constant 1 : index
    %c0_89 = arith.constant 0 : index
    %51 = vector.load %arg5[%c0_86, %c1_87, %c1_88, %c0_89] : memref<2x6x10x16xf32, #tpu.memory_space<vmem>>, vector<2x4x8x16xf32>
    %c0_90 = arith.constant 0 : index
    %c1_91 = arith.constant 1 : index
    %c2_92 = arith.constant 2 : index
    %c0_93 = arith.constant 0 : index
    %52 = vector.load %arg5[%c0_90, %c1_91, %c2_92, %c0_93] : memref<2x6x10x16xf32, #tpu.memory_space<vmem>>, vector<2x4x8x16xf32>
    %c0_94 = arith.constant 0 : index
    %c2_95 = arith.constant 2 : index
    %c0_96 = arith.constant 0 : index
    %c0_97 = arith.constant 0 : index
    %53 = vector.load %arg5[%c0_94, %c2_95, %c0_96, %c0_97] : memref<2x6x10x16xf32, #tpu.memory_space<vmem>>, vector<2x4x8x16xf32>
    %c0_98 = arith.constant 0 : index
    %c2_99 = arith.constant 2 : index
    %c1_100 = arith.constant 1 : index
    %c0_101 = arith.constant 0 : index
    %54 = vector.load %arg5[%c0_98, %c2_99, %c1_100, %c0_101] : memref<2x6x10x16xf32, #tpu.memory_space<vmem>>, vector<2x4x8x16xf32>
    %c0_102 = arith.constant 0 : index
    %c2_103 = arith.constant 2 : index
    %c2_104 = arith.constant 2 : index
    %c0_105 = arith.constant 0 : index
    %55 = vector.load %arg5[%c0_102, %c2_103, %c2_104, %c0_105] : memref<2x6x10x16xf32, #tpu.memory_space<vmem>>, vector<2x4x8x16xf32>
    %56 = tpu.concatenate %47, %48, %49, %50, %51, %52, %53, %54, %55 in 3 : vector<2x4x8x16xf32>, vector<2x4x8x16xf32>, vector<2x4x8x16xf32>, vector<2x4x8x16xf32>, vector<2x4x8x16xf32>, vector<2x4x8x16xf32>, vector<2x4x8x16xf32>, vector<2x4x8x16xf32>, vector<2x4x8x16xf32> -> vector<2x4x8x144xf32>
    %57 = vector.shape_cast %56 : vector<2x4x8x144xf32> to vector<64x144xf32>
    %c72 = arith.constant 72 : index
    %c0_106 = arith.constant 0 : index
    %58 = vector.load %arg1[%c72, %c0_106] : memref<568x64xf32, #tpu.memory_space<vmem>>, vector<144x32xf32>
    %c1_107 = arith.constant 1 : index
    %c0_108 = arith.constant 0 : index
    %59 = vector.load %arg2[%c1_107, %c0_108] : memref<8x64xf32, #tpu.memory_space<vmem>>, vector<1x32xf32>
    %cst_109 = arith.constant dense<0.000000e+00> : vector<64x32xf32>
    %60 = tpu.matmul %57, %58, %cst_109 {dimension_numbers = #tpu.dot_dimension_numbers<[1], [0], [0], [1], [0, 0, 1, 1], [], []>} : vector<64x144xf32>, vector<144x32xf32>, vector<64x32xf32> -> vector<64x32xf32>
    %61 = vector.broadcast %59 : vector<1x32xf32> to vector<64x32xf32>
    %62 = arith.addf %60, %61 : vector<64x32xf32>
    %cst_110 = arith.constant 0.000000e+00 : f32
    %63 = vector.broadcast %cst_110 : f32 to vector<64x32xf32>
    %64 = arith.maximumf %62, %63 : vector<64x32xf32>
    %65 = vector.shape_cast %64 : vector<64x32xf32> to vector<2x4x8x32xf32>
    %66 = vector.shape_cast %65 : vector<2x4x8x32xf32> to vector<2x2x2x8x32xf32>
    %67 = vector.extract_strided_slice %66 {offsets = [0, 0, 0, 0, 0], sizes = [2, 2, 1, 8, 32], strides = [1, 1, 1, 1, 1]} : vector<2x2x2x8x32xf32> to vector<2x2x1x8x32xf32>
    %68 = vector.shape_cast %67 : vector<2x2x1x8x32xf32> to vector<2x2x8x32xf32>
    %69 = vector.extract_strided_slice %66 {offsets = [0, 0, 1, 0, 0], sizes = [2, 2, 1, 8, 32], strides = [1, 1, 1, 1, 1]} : vector<2x2x2x8x32xf32> to vector<2x2x1x8x32xf32>
    %70 = vector.shape_cast %69 : vector<2x2x1x8x32xf32> to vector<2x2x8x32xf32>
    %71 = arith.maximumf %68, %70 : vector<2x2x8x32xf32>
    %cst_111 = arith.constant 0.000000e+00 : f32
    %72 = vector.broadcast %cst_111 : f32 to vector<2x4x10x32xf32>
    %c0_112 = arith.constant 0 : index
    %c0_113 = arith.constant 0 : index
    %c0_114 = arith.constant 0 : index
    %c0_115 = arith.constant 0 : index
    %73 = vector.load %arg6[%c0_112, %c0_113, %c0_114, %c0_115] : memref<2x4x10x32xf32, #tpu.memory_space<vmem>>, vector<2x4x10x32xf32>
    tpu.vector_store %arg6[%c0_112, %c0_113, %c0_114, %c0_115], %72 {strides = array<i32>} : memref<2x4x10x32xf32, #tpu.memory_space<vmem>>, vector<2x4x10x32xf32>,
    %74 = vector.extract_strided_slice %71 {offsets = [0, 0, 0, 0], sizes = [2, 2, 1, 32], strides = [1, 1, 1, 1]} : vector<2x2x8x32xf32> to vector<2x2x1x32xf32>
    %75 = vector.extract_strided_slice %71 {offsets = [0, 0, 1, 0], sizes = [2, 2, 1, 32], strides = [1, 1, 1, 1]} : vector<2x2x8x32xf32> to vector<2x2x1x32xf32>
    %76 = arith.maximumf %74, %75 : vector<2x2x1x32xf32>
    %c0_116 = arith.constant 0 : index
    %c1_117 = arith.constant 1 : index
    %c1_118 = arith.constant 1 : index
    %c0_119 = arith.constant 0 : index
    %77 = vector.load %arg6[%c0_116, %c1_117, %c1_118, %c0_119] : memref<2x4x10x32xf32, #tpu.memory_space<vmem>>, vector<2x2x1x32xf32>
    tpu.vector_store %arg6[%c0_116, %c1_117, %c1_118, %c0_119], %76 {strides = array<i32>} : memref<2x4x10x32xf32, #tpu.memory_space<vmem>>, vector<2x2x1x32xf32>,
    %78 = vector.extract_strided_slice %71 {offsets = [0, 0, 2, 0], sizes = [2, 2, 1, 32], strides = [1, 1, 1, 1]} : vector<2x2x8x32xf32> to vector<2x2x1x32xf32>
    %79 = vector.extract_strided_slice %71 {offsets = [0, 0, 3, 0], sizes = [2, 2, 1, 32], strides = [1, 1, 1, 1]} : vector<2x2x8x32xf32> to vector<2x2x1x32xf32>
    %80 = arith.maximumf %78, %79 : vector<2x2x1x32xf32>
    %c0_120 = arith.constant 0 : index
    %c1_121 = arith.constant 1 : index
    %c2_122 = arith.constant 2 : index
    %c0_123 = arith.constant 0 : index
    %81 = vector.load %arg6[%c0_120, %c1_121, %c2_122, %c0_123] : memref<2x4x10x32xf32, #tpu.memory_space<vmem>>, vector<2x2x1x32xf32>
    tpu.vector_store %arg6[%c0_120, %c1_121, %c2_122, %c0_123], %80 {strides = array<i32>} : memref<2x4x10x32xf32, #tpu.memory_space<vmem>>, vector<2x2x1x32xf32>,
    %c0_124 = arith.constant 0 : index
    %c0_125 = arith.constant 0 : index
    %c0_126 = arith.constant 0 : index
    %c0_127 = arith.constant 0 : index
    %82 = vector.load %arg6[%c0_124, %c0_125, %c0_126, %c0_127] : memref<2x4x10x32xf32, #tpu.memory_space<vmem>>, vector<2x2x8x32xf32>
    %c0_128 = arith.constant 0 : index
    %c0_129 = arith.constant 0 : index
    %c1_130 = arith.constant 1 : index
    %c0_131 = arith.constant 0 : index
    %83 = vector.load %arg6[%c0_128, %c0_129, %c1_130, %c0_131] : memref<2x4x10x32xf32, #tpu.memory_space<vmem>>, vector<2x2x8x32xf32>
    %c0_132 = arith.constant 0 : index
    %c0_133 = arith.constant 0 : index
    %c2_134 = arith.constant 2 : index
    %c0_135 = arith.constant 0 : index
    %84 = vector.load %arg6[%c0_132, %c0_133, %c2_134, %c0_135] : memref<2x4x10x32xf32, #tpu.memory_space<vmem>>, vector<2x2x8x32xf32>
    %c0_136 = arith.constant 0 : index
    %c1_137 = arith.constant 1 : index
    %c0_138 = arith.constant 0 : index
    %c0_139 = arith.constant 0 : index
    %85 = vector.load %arg6[%c0_136, %c1_137, %c0_138, %c0_139] : memref<2x4x10x32xf32, #tpu.memory_space<vmem>>, vector<2x2x8x32xf32>
    %c0_140 = arith.constant 0 : index
    %c1_141 = arith.constant 1 : index
    %c1_142 = arith.constant 1 : index
    %c0_143 = arith.constant 0 : index
    %86 = vector.load %arg6[%c0_140, %c1_141, %c1_142, %c0_143] : memref<2x4x10x32xf32, #tpu.memory_space<vmem>>, vector<2x2x8x32xf32>
    %c0_144 = arith.constant 0 : index
    %c1_145 = arith.constant 1 : index
    %c2_146 = arith.constant 2 : index
    %c0_147 = arith.constant 0 : index
    %87 = vector.load %arg6[%c0_144, %c1_145, %c2_146, %c0_147] : memref<2x4x10x32xf32, #tpu.memory_space<vmem>>, vector<2x2x8x32xf32>
    %c0_148 = arith.constant 0 : index
    %c2_149 = arith.constant 2 : index
    %c0_150 = arith.constant 0 : index
    %c0_151 = arith.constant 0 : index
    %88 = vector.load %arg6[%c0_148, %c2_149, %c0_150, %c0_151] : memref<2x4x10x32xf32, #tpu.memory_space<vmem>>, vector<2x2x8x32xf32>
    %c0_152 = arith.constant 0 : index
    %c2_153 = arith.constant 2 : index
    %c1_154 = arith.constant 1 : index
    %c0_155 = arith.constant 0 : index
    %89 = vector.load %arg6[%c0_152, %c2_153, %c1_154, %c0_155] : memref<2x4x10x32xf32, #tpu.memory_space<vmem>>, vector<2x2x8x32xf32>
    %c0_156 = arith.constant 0 : index
    %c2_157 = arith.constant 2 : index
    %c2_158 = arith.constant 2 : index
    %c0_159 = arith.constant 0 : index
    %90 = vector.load %arg6[%c0_156, %c2_157, %c2_158, %c0_159] : memref<2x4x10x32xf32, #tpu.memory_space<vmem>>, vector<2x2x8x32xf32>
    %91 = tpu.concatenate %82, %83, %84, %85, %86, %87, %88, %89, %90 in 3 : vector<2x2x8x32xf32>, vector<2x2x8x32xf32>, vector<2x2x8x32xf32>, vector<2x2x8x32xf32>, vector<2x2x8x32xf32>, vector<2x2x8x32xf32>, vector<2x2x8x32xf32>, vector<2x2x8x32xf32>, vector<2x2x8x32xf32> -> vector<2x2x8x288xf32>
    %92 = vector.shape_cast %91 : vector<2x2x8x288xf32> to vector<32x288xf32>
    %c216 = arith.constant 216 : index
    %c0_160 = arith.constant 0 : index
    %93 = vector.load %arg1[%c216, %c0_160] : memref<568x64xf32, #tpu.memory_space<vmem>>, vector<288x64xf32>
    %c2_161 = arith.constant 2 : index
    %c0_162 = arith.constant 0 : index
    %94 = vector.load %arg2[%c2_161, %c0_162] : memref<8x64xf32, #tpu.memory_space<vmem>>, vector<1x64xf32>
    %cst_163 = arith.constant dense<0.000000e+00> : vector<32x64xf32>
    %95 = tpu.matmul %92, %93, %cst_163 {dimension_numbers = #tpu.dot_dimension_numbers<[1], [0], [0], [1], [0, 0, 1, 1], [], []>} : vector<32x288xf32>, vector<288x64xf32>, vector<32x64xf32> -> vector<32x64xf32>
    %96 = vector.broadcast %94 : vector<1x64xf32> to vector<32x64xf32>
    %97 = arith.addf %95, %96 : vector<32x64xf32>
    %cst_164 = arith.constant 0.000000e+00 : f32
    %98 = vector.broadcast %cst_164 : f32 to vector<32x64xf32>
    %99 = arith.maximumf %97, %98 : vector<32x64xf32>
    %100 = vector.shape_cast %99 : vector<32x64xf32> to vector<2x2x8x64xf32>
    %101 = vector.extract_strided_slice %100 {offsets = [0, 0, 0, 0], sizes = [2, 1, 2, 64], strides = [1, 1, 1, 1]} : vector<2x2x8x64xf32> to vector<2x1x2x64xf32>
    %102 = vector.shape_cast %101 : vector<2x1x2x64xf32> to vector<2x2x64xf32>
    %103 = vector.extract_strided_slice %100 {offsets = [0, 1, 0, 0], sizes = [2, 1, 2, 64], strides = [1, 1, 1, 1]} : vector<2x2x8x64xf32> to vector<2x1x2x64xf32>
    %104 = vector.shape_cast %103 : vector<2x1x2x64xf32> to vector<2x2x64xf32>
    %105 = arith.maximumf %102, %104 : vector<2x2x64xf32>
    %cst_165 = arith.constant dense<0xFF800000> : vector<2x64xf32>
    %106 = vector.multi_reduction <maximumf>, %105, %cst_165 [1] : vector<2x2x64xf32> to vector<2x64xf32>
    %c504 = arith.constant 504 : index
    %c0_166 = arith.constant 0 : index
    %107 = vector.load %arg1[%c504, %c0_166] : memref<568x64xf32, #tpu.memory_space<vmem>>, vector<64x32xf32>
    %c3_167 = arith.constant 3 : index
    %c0_168 = arith.constant 0 : index
    %108 = vector.load %arg2[%c3_167, %c0_168] : memref<8x64xf32, #tpu.memory_space<vmem>>, vector<1x32xf32>
    %c4_169 = arith.constant 4 : index
    %c0_170 = arith.constant 0 : index
    %109 = vector.load %arg2[%c4_169, %c0_170] : memref<8x64xf32, #tpu.memory_space<vmem>>, vector<1x32xf32>
    %c5 = arith.constant 5 : index
    %c0_171 = arith.constant 0 : index
    %110 = vector.load %arg2[%c5, %c0_171] : memref<8x64xf32, #tpu.memory_space<vmem>>, vector<1x1xf32>
    %cst_172 = arith.constant dense<0.000000e+00> : vector<2x32xf32>
    %111 = tpu.matmul %106, %107, %cst_172 {dimension_numbers = #tpu.dot_dimension_numbers<[1], [0], [0], [1], [0, 0, 1, 1], [], []>} : vector<2x64xf32>, vector<64x32xf32>, vector<2x32xf32> -> vector<2x32xf32>
    %112 = vector.broadcast %108 : vector<1x32xf32> to vector<2x32xf32>
    %113 = arith.addf %111, %112 : vector<2x32xf32>
    %cst_173 = arith.constant 0.000000e+00 : f32
    %114 = vector.broadcast %cst_173 : f32 to vector<2x32xf32>
    %115 = arith.maximumf %113, %114 : vector<2x32xf32>
    %116 = vector.broadcast %109 : vector<1x32xf32> to vector<2x32xf32>
    %117 = arith.mulf %115, %116 : vector<2x32xf32>
    %cst_174 = arith.constant dense<0.000000e+00> : vector<2xf32>
    %118 = vector.multi_reduction <add>, %117, %cst_174 [1] : vector<2x32xf32> to vector<2xf32>
    %119 = vector.shape_cast %118 : vector<2xf32> to vector<2x1xf32>
    %120 = vector.broadcast %110 : vector<1x1xf32> to vector<2x1xf32>
    %121 = arith.addf %119, %120 : vector<2x1xf32>
    %c0_175 = arith.constant 0 : index
    %c0_176 = arith.constant 0 : index
    %122 = vector.load %arg3[%c0_175, %c0_176] : memref<2x1xf32, #tpu.memory_space<vmem>>, vector<2x1xf32>
    tpu.vector_store %arg3[%c0_175, %c0_176], %121 {strides = array<i32>} : memref<2x1xf32, #tpu.memory_space<vmem>>, vector<2x1xf32>,
    return
  }
}

</mosaic_0001>

<llo_original>
// kernel: net6_forward.1
$region0: #{net6_forward.1}
  #allocation0 [shape = 'u32[]', space=smem, size = 0x4, offset = 0x4, fixed_abs, tag = 'smem constant byte address 0x4 - core index']
  #allocation1 [shape = 'u32[144,128]{1,0:T(1,128)}', space=vmem, size = 0x12000, scoped, tag = 'internal scratch']
  #allocation2 [shape = 'f32[2,10,10,8]{3,2,1,0:T(8,128)}', space=vmem, size = 0x28000, scoped, tag = 'scratch operand']
  #allocation3 [shape = 'f32[2,6,10,16]{3,2,1,0:T(8,128)}', space=vmem, size = 0x18000, scoped, tag = 'scratch operand']
  #allocation4 [shape = 'f32[2,4,10,32]{3,2,1,0:T(8,128)}', space=vmem, size = 0x10000, scoped, tag = 'scratch operand']
  %s0 = inlined_call_operand.vmem [shape: f32[2,8,8,7], index: 0, kind: input, shape index: {}]
  %s1 = inlined_call_operand.vmem [shape: f32[568,64], index: 1, kind: input, shape index: {}]
  %s2 = inlined_call_operand.vmem [shape: f32[8,64], index: 2, kind: input, shape index: {}]
  %s3 = inlined_call_operand.vmem [shape: f32[2,1], index: 3, kind: output, shape index: {}]
  %s4 = sld [smem:[#allocation0]]
  $region22: #{net6_forward.1} parent=0
    _
  %s6 = ssub.s32 1, %s4
  %s7 = scalar_select 0, %s6, %s4
  // Predicated region
  $region2: #{net6_forward.1} parent=0 // pred_check
    _
  $region3: #{net6_forward.1} parent=0 // pred_check_branch
    %9 = sbr.rel (0) target = $region5
  $region4: #{net6_forward.1} parent=0 // pred_region
    _
  $region5: #{net6_forward.1} parent=0 // pred_fallthru
    _
  // Predicated region
  $region6: #{net6_forward.1} parent=0 // pred_check
    _
  $region7: #{net6_forward.1} parent=0 // pred_check_branch
    %11 = sbr.rel (0) target = $region9
  $region8: #{net6_forward.1} parent=0 // pred_region
    _
  $region9: #{net6_forward.1} parent=0 // pred_fallthru
    _
  // Predicated region
  $region10: #{net6_forward.1} parent=0 // pred_check
    _
  $region11: #{net6_forward.1} parent=0 // pred_check_branch
    %13 = sbr.rel (0) target = $region13
  $region12: #{net6_forward.1} parent=0 // pred_region
    _
  $region13: #{net6_forward.1} parent=0 // pred_fallthru
    _
  %vm14 = vcmask 64512
  %15 = vst.msk [vmem:[#allocation2] sm:$0xff] %vm14, 0.0
  %vm16 = vcmask 58368
  %17 = vst.msk [vmem:[#allocation2 + $0x8] sm:$0x3] %vm16, 0.0
  %18 = vst.msk [vmem:[#allocation2 + $0x10] sm:$0xff] %vm14, 0.0
  %19 = vst.msk [vmem:[#allocation2 + $0x18] sm:$0x3] %vm16, 0.0
  %20 = vst.msk [vmem:[#allocation2 + $0x20] sm:$0xff] %vm14, 0.0
  %21 = vst.msk [vmem:[#allocation2 + $0x28] sm:$0x3] %vm16, 0.0
  %22 = vst.msk [vmem:[#allocation2 + $0x30] sm:$0xff] %vm14, 0.0
  %23 = vst.msk [vmem:[#allocation2 + $0x38] sm:$0x3] %vm16, 0.0
  %24 = vst.msk [vmem:[#allocation2 + $0x40] sm:$0xff] %vm14, 0.0
  %25 = vst.msk [vmem:[#allocation2 + $0x48] sm:$0x3] %vm16, 0.0
  %26 = vst.msk [vmem:[#allocation2 + $0x50] sm:$0xff] %vm14, 0.0
  %27 = vst.msk [vmem:[#allocation2 + $0x58] sm:$0x3] %vm16, 0.0
  %28 = vst.msk [vmem:[#allocation2 + $0x60] sm:$0xff] %vm14, 0.0
  %29 = vst.msk [vmem:[#allocation2 + $0x68] sm:$0x3] %vm16, 0.0
  %30 = vst.msk [vmem:[#allocation2 + $0x70] sm:$0xff] %vm14, 0.0
  %31 = vst.msk [vmem:[#allocation2 + $0x78] sm:$0x3] %vm16, 0.0
  %32 = vst.msk [vmem:[#allocation2 + $0x80] sm:$0xff] %vm14, 0.0
  %33 = vst.msk [vmem:[#allocation2 + $0x88] sm:$0x3] %vm16, 0.0
  %34 = vst.msk [vmem:[#allocation2 + $0x90] sm:$0xff] %vm14, 0.0
  %35 = vst.msk [vmem:[#allocation2 + $0x98] sm:$0x3] %vm16, 0.0
  %36 = vst.msk [vmem:[#allocation2 + $0xa0] sm:$0xff] %vm14, 0.0
  %37 = vst.msk [vmem:[#allocation2 + $0xa8] sm:$0x3] %vm16, 0.0
  %38 = vst.msk [vmem:[#allocation2 + $0xb0] sm:$0xff] %vm14, 0.0
  %39 = vst.msk [vmem:[#allocation2 + $0xb8] sm:$0x3] %vm16, 0.0
  %40 = vst.msk [vmem:[#allocation2 + $0xc0] sm:$0xff] %vm14, 0.0
  %41 = vst.msk [vmem:[#allocation2 + $0xc8] sm:$0x3] %vm16, 0.0
  %42 = vst.msk [vmem:[#allocation2 + $0xd0] sm:$0xff] %vm14, 0.0
  %43 = vst.msk [vmem:[#allocation2 + $0xd8] sm:$0x3] %vm16, 0.0
  %44 = vst.msk [vmem:[#allocation2 + $0xe0] sm:$0xff] %vm14, 0.0
  %45 = vst.msk [vmem:[#allocation2 + $0xe8] sm:$0x3] %vm16, 0.0
  %46 = vst.msk [vmem:[#allocation2 + $0xf0] sm:$0xff] %vm14, 0.0
  %47 = vst.msk [vmem:[#allocation2 + $0xf8] sm:$0x3] %vm16, 0.0
  %48 = vst.msk [vmem:[#allocation2 + $0x100] sm:$0xff] %vm14, 0.0
  %49 = vst.msk [vmem:[#allocation2 + $0x108] sm:$0x3] %vm16, 0.0
  %50 = vst.msk [vmem:[#allocation2 + $0x110] sm:$0xff] %vm14, 0.0
  %51 = vst.msk [vmem:[#allocation2 + $0x118] sm:$0x3] %vm16, 0.0
  %52 = vst.msk [vmem:[#allocation2 + $0x120] sm:$0xff] %vm14, 0.0
  %53 = vst.msk [vmem:[#allocation2 + $0x128] sm:$0x3] %vm16, 0.0
  %54 = vst.msk [vmem:[#allocation2 + $0x130] sm:$0xff] %vm14, 0.0
  %55 = vst.msk [vmem:[#allocation2 + $0x138] sm:$0x3] %vm16, 0.0
  %v56 = vld [vmem:[%s0] sm:$0xff]
  %v57 = vld [vmem:[%s0 + $0x8] sm:$0xff]
  %v58 = vld [vmem:[%s0 + $0x10] sm:$0xff]
  %v59 = vld [vmem:[%s0 + $0x18] sm:$0xff]
  %v60 = vld [vmem:[%s0 + $0x20] sm:$0xff]
  %v61 = vld [vmem:[%s0 + $0x28] sm:$0xff]
  %v62 = vld [vmem:[%s0 + $0x30] sm:$0xff]
  %v63 = vld [vmem:[%s0 + $0x38] sm:$0xff]
  %v64 = vld [vmem:[%s0 + $0x40] sm:$0xff]
  %v65 = vld [vmem:[%s0 + $0x48] sm:$0xff]
  %v66 = vld [vmem:[%s0 + $0x50] sm:$0xff]
  %v67 = vld [vmem:[%s0 + $0x58] sm:$0xff]
  %v68 = vld [vmem:[%s0 + $0x60] sm:$0xff]
  %v69 = vld [vmem:[%s0 + $0x68] sm:$0xff]
  %v70 = vld [vmem:[%s0 + $0x70] sm:$0xff]
  %v71 = vld [vmem:[%s0 + $0x78] sm:$0xff]
  %s72 = scalar_lea.vmem [#allocation2], 16
  %vm73 = vcmask 56320
  %74 = vst.msk [vmem:[%s72 + $0x1] sm:$0xff] %vm73, %v56
  %75 = vst.msk [vmem:[%s72 + $0x11] sm:$0xff] %vm73, %v57
  %76 = vst.msk [vmem:[%s72 + $0x21] sm:$0xff] %vm73, %v58
  %77 = vst.msk [vmem:[%s72 + $0x31] sm:$0xff] %vm73, %v59
  %78 = vst.msk [vmem:[%s72 + $0x41] sm:$0xff] %vm73, %v60
  %79 = vst.msk [vmem:[%s72 + $0x51] sm:$0xff] %vm73, %v61
  %80 = vst.msk [vmem:[%s72 + $0x61] sm:$0xff] %vm73, %v62
  %81 = vst.msk [vmem:[%s72 + $0x71] sm:$0xff] %vm73, %v63
  %82 = vst.msk [vmem:[%s72 + $0xa1] sm:$0xff] %vm73, %v64
  %83 = vst.msk [vmem:[%s72 + $0xb1] sm:$0xff] %vm73, %v65
  %84 = vst.msk [vmem:[%s72 + $0xc1] sm:$0xff] %vm73, %v66
  %85 = vst.msk [vmem:[%s72 + $0xd1] sm:$0xff] %vm73, %v67
  %86 = vst.msk [vmem:[%s72 + $0xe1] sm:$0xff] %vm73, %v68
  %87 = vst.msk [vmem:[%s72 + $0xf1] sm:$0xff] %vm73, %v69
  %88 = vst.msk [vmem:[%s72 + $0x101] sm:$0xff] %vm73, %v70
  %89 = vst.msk [vmem:[%s72 + $0x111] sm:$0xff] %vm73, %v71
  %v90 = vld [vmem:[#allocation2] sm:$0xff]
  %v91 = vld [vmem:[#allocation2 + $0x10] sm:$0xff]
  %v92 = vld [vmem:[#allocation2 + $0x20] sm:$0xff]
  %v93 = vld [vmem:[#allocation2 + $0x30] sm:$0xff]
  %v94 = vld [vmem:[#allocation2 + $0x40] sm:$0xff]
  %v95 = vld [vmem:[#allocation2 + $0x50] sm:$0xff]
  %v96 = vld [vmem:[#allocation2 + $0x60] sm:$0xff]
  %v97 = vld [vmem:[#allocation2 + $0x70] sm:$0xff]
  %v98 = vld [vmem:[#allocation2 + $0xa0] sm:$0xff]
  %v99 = vld [vmem:[#allocation2 + $0xb0] sm:$0xff]
  %v100 = vld [vmem:[#allocation2 + $0xc0] sm:$0xff]
  %v101 = vld [vmem:[#allocation2 + $0xd0] sm:$0xff]
  %v102 = vld [vmem:[#allocation2 + $0xe0] sm:$0xff]
  %v103 = vld [vmem:[#allocation2 + $0xf0] sm:$0xff]
  %v104 = vld [vmem:[#allocation2 + $0x100] sm:$0xff]
  %v105 = vld [vmem:[#allocation2 + $0x110] sm:$0xff]
  %v106 = vld [vmem:[#allocation2 + $0x1] sm:$0xff]
  %v107 = vld [vmem:[#allocation2 + $0x11] sm:$0xff]
  %v108 = vld [vmem:[#allocation2 + $0x21] sm:$0xff]
  %v109 = vld [vmem:[#allocation2 + $0x31] sm:$0xff]
  %v110 = vld [vmem:[#allocation2 + $0x41] sm:$0xff]
  %v111 = vld [vmem:[#allocation2 + $0x51] sm:$0xff]
  %v112 = vld [vmem:[#allocation2 + $0x61] sm:$0xff]
  %v113 = vld [vmem:[#allocation2 + $0x71] sm:$0xff]
  %v114 = vld [vmem:[#allocation2 + $0xa1] sm:$0xff]
  %v115 = vld [vmem:[#allocation2 + $0xb1] sm:$0xff]
  %v116 = vld [vmem:[#allocation2 + $0xc1] sm:$0xff]
  %v117 = vld [vmem:[#allocation2 + $0xd1] sm:$0xff]
  %v118 = vld [vmem:[#allocation2 + $0xe1] sm:$0xff]
  %v119 = vld [vmem:[#allocation2 + $0xf1] sm:$0xff]
  %v120 = vld [vmem:[#allocation2 + $0x101] sm:$0xff]
  %v121 = vld [vmem:[#allocation2 + $0x111] sm:$0xff]
  %v122 = vld [vmem:[#allocation2 + $0x2] sm:$0xff]
  %v123 = vld [vmem:[#allocation2 + $0x12] sm:$0xff]
  %v124 = vld [vmem:[#allocation2 + $0x22] sm:$0xff]
  %v125 = vld [vmem:[#allocation2 + $0x32] sm:$0xff]
  %v126 = vld [vmem:[#allocation2 + $0x42] sm:$0xff]
  %v127 = vld [vmem:[#allocation2 + $0x52] sm:$0xff]
  %v128 = vld [vmem:[#allocation2 + $0x62] sm:$0xff]
  %v129 = vld [vmem:[#allocation2 + $0x72] sm:$0xff]
  %v130 = vld [vmem:[#allocation2 + $0xa2] sm:$0xff]
  %v131 = vld [vmem:[#allocation2 + $0xb2] sm:$0xff]
  %v132 = vld [vmem:[#allocation2 + $0xc2] sm:$0xff]
  %v133 = vld [vmem:[#allocation2 + $0xd2] sm:$0xff]
  %v134 = vld [vmem:[#allocation2 + $0xe2] sm:$0xff]
  %v135 = vld [vmem:[#allocation2 + $0xf2] sm:$0xff]
  %v136 = vld [vmem:[#allocation2 + $0x102] sm:$0xff]
  %v137 = vld [vmem:[#allocation2 + $0x112] sm:$0xff]
  %v138 = vld [vmem:[%s72] sm:$0xff]
  %v139 = vld [vmem:[%s72 + $0x10] sm:$0xff]
  %v140 = vld [vmem:[%s72 + $0x20] sm:$0xff]
  %v141 = vld [vmem:[%s72 + $0x30] sm:$0xff]
  %v142 = vld [vmem:[%s72 + $0x40] sm:$0xff]
  %v143 = vld [vmem:[%s72 + $0x50] sm:$0xff]
  %v144 = vld [vmem:[%s72 + $0x60] sm:$0xff]
  %v145 = vld [vmem:[%s72 + $0x70] sm:$0xff]
  %v146 = vld [vmem:[%s72 + $0xa0] sm:$0xff]
  %v147 = vld [vmem:[%s72 + $0xb0] sm:$0xff]
  %v148 = vld [vmem:[%s72 + $0xc0] sm:$0xff]
  %v149 = vld [vmem:[%s72 + $0xd0] sm:$0xff]
  %v150 = vld [vmem:[%s72 + $0xe0] sm:$0xff]
  %v151 = vld [vmem:[%s72 + $0xf0] sm:$0xff]
  %v152 = vld [vmem:[%s72 + $0x100] sm:$0xff]
  %v153 = vld [vmem:[%s72 + $0x110] sm:$0xff]
  %v154 = vld [vmem:[%s72 + $0x1] sm:$0xff]
  %v155 = vld [vmem:[%s72 + $0x11] sm:$0xff]
  %v156 = vld [vmem:[%s72 + $0x21] sm:$0xff]
  %v157 = vld [vmem:[%s72 + $0x31] sm:$0xff]
  %v158 = vld [vmem:[%s72 + $0x41] sm:$0xff]
  %v159 = vld [vmem:[%s72 + $0x51] sm:$0xff]
  %v160 = vld [vmem:[%s72 + $0x61] sm:$0xff]
  %v161 = vld [vmem:[%s72 + $0x71] sm:$0xff]
  %v162 = vld [vmem:[%s72 + $0xa1] sm:$0xff]
  %v163 = vld [vmem:[%s72 + $0xb1] sm:$0xff]
  %v164 = vld [vmem:[%s72 + $0xc1] sm:$0xff]
  %v165 = vld [vmem:[%s72 + $0xd1] sm:$0xff]
  %v166 = vld [vmem:[%s72 + $0xe1] sm:$0xff]
  %v167 = vld [vmem:[%s72 + $0xf1] sm:$0xff]
  %v168 = vld [vmem:[%s72 + $0x101] sm:$0xff]
  %v169 = vld [vmem:[%s72 + $0x111] sm:$0xff]
  %v170 = vld [vmem:[%s72 + $0x2] sm:$0xff]
  %v171 = vld [vmem:[%s72 + $0x12] sm:$0xff]
  %v172 = vld [vmem:[%s72 + $0x22] sm:$0xff]
  %v173 = vld [vmem:[%s72 + $0x32] sm:$0xff]
  %v174 = vld [vmem:[%s72 + $0x42] sm:$0xff]
  %v175 = vld [vmem:[%s72 + $0x52] sm:$0xff]
  %v176 = vld [vmem:[%s72 + $0x62] sm:$0xff]
  %v177 = vld [vmem:[%s72 + $0x72] sm:$0xff]
  %v178 = vld [vmem:[%s72 + $0xa2] sm:$0xff]
  %v179 = vld [vmem:[%s72 + $0xb2] sm:$0xff]
  %v180 = vld [vmem:[%s72 + $0xc2] sm:$0xff]
  %v181 = vld [vmem:[%s72 + $0xd2] sm:$0xff]
  %v182 = vld [vmem:[%s72 + $0xe2] sm:$0xff]
  %v183 = vld [vmem:[%s72 + $0xf2] sm:$0xff]
  %v184 = vld [vmem:[%s72 + $0x102] sm:$0xff]
  %v185 = vld [vmem:[%s72 + $0x112] sm:$0xff]
  %s186 = scalar_lea.vmem [#allocation2], 32
  %v187 = vld [vmem:[%s186] sm:$0xff]
  %v188 = vld [vmem:[%s186 + $0x10] sm:$0xff]
  %v189 = vld [vmem:[%s186 + $0x20] sm:$0xff]
  %v190 = vld [vmem:[%s186 + $0x30] sm:$0xff]
  %v191 = vld [vmem:[%s186 + $0x40] sm:$0xff]
  %v192 = vld [vmem:[%s186 + $0x50] sm:$0xff]
  %v193 = vld [vmem:[%s186 + $0x60] sm:$0xff]
  %v194 = vld [vmem:[%s186 + $0x70] sm:$0xff]
  %v195 = vld [vmem:[%s186 + $0xa0] sm:$0xff]
  %v196 = vld [vmem:[%s186 + $0xb0] sm:$0xff]
  %v197 = vld [vmem:[%s186 + $0xc0] sm:$0xff]
  %v198 = vld [vmem:[%s186 + $0xd0] sm:$0xff]
  %v199 = vld [vmem:[%s186 + $0xe0] sm:$0xff]
  %v200 = vld [vmem:[%s186 + $0xf0] sm:$0xff]
  %v201 = vld [vmem:[%s186 + $0x100] sm:$0xff]
  %v202 = vld [vmem:[%s186 + $0x110] sm:$0xff]
  %v203 = vld [vmem:[%s186 + $0x1] sm:$0xff]
  %v204 = vld [vmem:[%s186 + $0x11] sm:$0xff]
  %v205 = vld [vmem:[%s186 + $0x21] sm:$0xff]
  %v206 = vld [vmem:[%s186 + $0x31] sm:$0xff]
  %v207 = vld [vmem:[%s186 + $0x41] sm:$0xff]
  %v208 = vld [vmem:[%s186 + $0x51] sm:$0xff]
  %v209 = vld [vmem:[%s186 + $0x61] sm:$0xff]
  %v210 = vld [vmem:[%s186 + $0x71] sm:$0xff]
  %v211 = vld [vmem:[%s186 + $0xa1] sm:$0xff]
  %v212 = vld [vmem:[%s186 + $0xb1] sm:$0xff]
  %v213 = vld [vmem:[%s186 + $0xc1] sm:$0xff]
  %v214 = vld [vmem:[%s186 + $0xd1] sm:$0xff]
  %v215 = vld [vmem:[%s186 + $0xe1] sm:$0xff]
  %v216 = vld [vmem:[%s186 + $0xf1] sm:$0xff]
  %v217 = vld [vmem:[%s186 + $0x101] sm:$0xff]
  %v218 = vld [vmem:[%s186 + $0x111] sm:$0xff]
  %v219 = vld [vmem:[%s186 + $0x2] sm:$0xff]
  %v220 = vld [vmem:[%s186 + $0x12] sm:$0xff]
  %v221 = vld [vmem:[%s186 + $0x22] sm:$0xff]
  %v222 = vld [vmem:[%s186 + $0x32] sm:$0xff]
  %v223 = vld [vmem:[%s186 + $0x42] sm:$0xff]
  %v224 = vld [vmem:[%s186 + $0x52] sm:$0xff]
  %v225 = vld [vmem:[%s186 + $0x62] sm:$0xff]
  %v226 = vld [vmem:[%s186 + $0x72] sm:$0xff]
  %v227 = vld [vmem:[%s186 + $0xa2] sm:$0xff]
  %v228 = vld [vmem:[%s186 + $0xb2] sm:$0xff]
  %v229 = vld [vmem:[%s186 + $0xc2] sm:$0xff]
  %v230 = vld [vmem:[%s186 + $0xd2] sm:$0xff]
  %v231 = vld [vmem:[%s186 + $0xe2] sm:$0xff]
  %v232 = vld [vmem:[%s186 + $0xf2] sm:$0xff]
  %v233 = vld [vmem:[%s186 + $0x102] sm:$0xff]
  %v234 = vld [vmem:[%s186 + $0x112] sm:$0xff]
  %251 = vrot.lane.b32.xlu0 %v106, 8
  %v252 = vpop.permute.xlu0 %251
  %253 = vrot.lane.b32.xlu0 %v107, 8
  %v254 = vpop.permute.xlu0 %253
  %255 = vrot.lane.b32.xlu0 %v108, 8
  %v256 = vpop.permute.xlu0 %255
  %257 = vrot.lane.b32.xlu0 %v109, 8
  %v258 = vpop.permute.xlu0 %257
  %259 = vrot.lane.b32.xlu0 %v110, 8
  %v260 = vpop.permute.xlu0 %259
  %261 = vrot.lane.b32.xlu0 %v111, 8
  %v262 = vpop.permute.xlu0 %261
  %263 = vrot.lane.b32.xlu0 %v112, 8
  %v264 = vpop.permute.xlu0 %263
  %265 = vrot.lane.b32.xlu0 %v113, 8
  %v266 = vpop.permute.xlu0 %265
  %267 = vrot.lane.b32.xlu0 %v114, 8
  %v268 = vpop.permute.xlu0 %267
  %269 = vrot.lane.b32.xlu0 %v115, 8
  %v270 = vpop.permute.xlu0 %269
  %271 = vrot.lane.b32.xlu0 %v116, 8
  %v272 = vpop.permute.xlu0 %271
  %273 = vrot.lane.b32.xlu0 %v117, 8
  %v274 = vpop.permute.xlu0 %273
  %275 = vrot.lane.b32.xlu0 %v118, 8
  %v276 = vpop.permute.xlu0 %275
  %277 = vrot.lane.b32.xlu0 %v119, 8
  %v278 = vpop.permute.xlu0 %277
  %279 = vrot.lane.b32.xlu0 %v120, 8
  %v280 = vpop.permute.xlu0 %279
  %281 = vrot.lane.b32.xlu0 %v121, 8
  %v282 = vpop.permute.xlu0 %281
  %315 = vrot.lane.b32.xlu0 %v122, 16
  %v316 = vpop.permute.xlu0 %315
  %317 = vrot.lane.b32.xlu0 %v123, 16
  %v318 = vpop.permute.xlu0 %317
  %319 = vrot.lane.b32.xlu0 %v124, 16
  %v320 = vpop.permute.xlu0 %319
  %321 = vrot.lane.b32.xlu0 %v125, 16
  %v322 = vpop.permute.xlu0 %321
  %323 = vrot.lane.b32.xlu0 %v126, 16
  %v324 = vpop.permute.xlu0 %323
  %325 = vrot.lane.b32.xlu0 %v127, 16
  %v326 = vpop.permute.xlu0 %325
  %327 = vrot.lane.b32.xlu0 %v128, 16
  %v328 = vpop.permute.xlu0 %327
  %329 = vrot.lane.b32.xlu0 %v129, 16
  %v330 = vpop.permute.xlu0 %329
  %331 = vrot.lane.b32.xlu0 %v130, 16
  %v332 = vpop.permute.xlu0 %331
  %333 = vrot.lane.b32.xlu0 %v131, 16
  %v334 = vpop.permute.xlu0 %333
  %335 = vrot.lane.b32.xlu0 %v132, 16
  %v336 = vpop.permute.xlu0 %335
  %337 = vrot.lane.b32.xlu0 %v133, 16
  %v338 = vpop.permute.xlu0 %337
  %339 = vrot.lane.b32.xlu0 %v134, 16
  %v340 = vpop.permute.xlu0 %339
  %341 = vrot.lane.b32.xlu0 %v135, 16
  %v342 = vpop.permute.xlu0 %341
  %343 = vrot.lane.b32.xlu0 %v136, 16
  %v344 = vpop.permute.xlu0 %343
  %345 = vrot.lane.b32.xlu0 %v137, 16
  %v346 = vpop.permute.xlu0 %345
  %379 = vrot.lane.b32.xlu0 %v138, 24
  %v380 = vpop.permute.xlu0 %379
  %381 = vrot.lane.b32.xlu0 %v139, 24
  %v382 = vpop.permute.xlu0 %381
  %383 = vrot.lane.b32.xlu0 %v140, 24
  %v384 = vpop.permute.xlu0 %383
  %385 = vrot.lane.b32.xlu0 %v141, 24
  %v386 = vpop.permute.xlu0 %385
  %387 = vrot.lane.b32.xlu0 %v142, 24
  %v388 = vpop.permute.xlu0 %387
  %389 = vrot.lane.b32.xlu0 %v143, 24
  %v390 = vpop.permute.xlu0 %389
  %391 = vrot.lane.b32.xlu0 %v144, 24
  %v392 = vpop.permute.xlu0 %391
  %393 = vrot.lane.b32.xlu0 %v145, 24
  %v394 = vpop.permute.xlu0 %393
  %395 = vrot.lane.b32.xlu0 %v146, 24
  %v396 = vpop.permute.xlu0 %395
  %397 = vrot.lane.b32.xlu0 %v147, 24
  %v398 = vpop.permute.xlu0 %397
  %399 = vrot.lane.b32.xlu0 %v148, 24
  %v400 = vpop.permute.xlu0 %399
  %401 = vrot.lane.b32.xlu0 %v149, 24
  %v402 = vpop.permute.xlu0 %401
  %403 = vrot.lane.b32.xlu0 %v150, 24
  %v404 = vpop.permute.xlu0 %403
  %405 = vrot.lane.b32.xlu0 %v151, 24
  %v406 = vpop.permute.xlu0 %405
  %407 = vrot.lane.b32.xlu0 %v152, 24
  %v408 = vpop.permute.xlu0 %407
  %409 = vrot.lane.b32.xlu0 %v153, 24
  %v410 = vpop.permute.xlu0 %409
  %443 = vrot.lane.b32.xlu0 %v154, 32
  %v444 = vpop.permute.xlu0 %443
  %445 = vrot.lane.b32.xlu0 %v155, 32
  %v446 = vpop.permute.xlu0 %445
  %447 = vrot.lane.b32.xlu0 %v156, 32
  %v448 = vpop.permute.xlu0 %447
  %449 = vrot.lane.b32.xlu0 %v157, 32
  %v450 = vpop.permute.xlu0 %449
  %451 = vrot.lane.b32.xlu0 %v158, 32
  %v452 = vpop.permute.xlu0 %451
  %453 = vrot.lane.b32.xlu0 %v159, 32
  %v454 = vpop.permute.xlu0 %453
  %455 = vrot.lane.b32.xlu0 %v160, 32
  %v456 = vpop.permute.xlu0 %455
  %457 = vrot.lane.b32.xlu0 %v161, 32
  %v458 = vpop.permute.xlu0 %457
  %459 = vrot.lane.b32.xlu0 %v162, 32
  %v460 = vpop.permute.xlu0 %459
  %461 = vrot.lane.b32.xlu0 %v163, 32
  %v462 = vpop.permute.xlu0 %461
  %463 = vrot.lane.b32.xlu0 %v164, 32
  %v464 = vpop.permute.xlu0 %463
  %465 = vrot.lane.b32.xlu0 %v165, 32
  %v466 = vpop.permute.xlu0 %465
  %467 = vrot.lane.b32.xlu0 %v166, 32
  %v468 = vpop.permute.xlu0 %467
  %469 = vrot.lane.b32.xlu0 %v167, 32
  %v470 = vpop.permute.xlu0 %469
  %471 = vrot.lane.b32.xlu0 %v168, 32
  %v472 = vpop.permute.xlu0 %471
  %473 = vrot.lane.b32.xlu0 %v169, 32
  %v474 = vpop.permute.xlu0 %473
  %507 = vrot.lane.b32.xlu0 %v170, 40
  %v508 = vpop.permute.xlu0 %507
  %509 = vrot.lane.b32.xlu0 %v171, 40
  %v510 = vpop.permute.xlu0 %509
  %511 = vrot.lane.b32.xlu0 %v172, 40
  %v512 = vpop.permute.xlu0 %511
  %513 = vrot.lane.b32.xlu0 %v173, 40
  %v514 = vpop.permute.xlu0 %513
  %515 = vrot.lane.b32.xlu0 %v174, 40
  %v516 = vpop.permute.xlu0 %515
  %517 = vrot.lane.b32.xlu0 %v175, 40
  %v518 = vpop.permute.xlu0 %517
  %519 = vrot.lane.b32.xlu0 %v176, 40
  %v520 = vpop.permute.xlu0 %519
  %521 = vrot.lane.b32.xlu0 %v177, 40
  %v522 = vpop.permute.xlu0 %521
  %523 = vrot.lane.b32.xlu0 %v178, 40
  %v524 = vpop.permute.xlu0 %523
  %525 = vrot.lane.b32.xlu0 %v179, 40
  %v526 = vpop.permute.xlu0 %525
  %527 = vrot.lane.b32.xlu0 %v180, 40
  %v528 = vpop.permute.xlu0 %527
  %529 = vrot.lane.b32.xlu0 %v181, 40
  %v530 = vpop.permute.xlu0 %529
  %531 = vrot.lane.b32.xlu0 %v182, 40
  %v532 = vpop.permute.xlu0 %531
  %533 = vrot.lane.b32.xlu0 %v183, 40
  %v534 = vpop.permute.xlu0 %533
  %535 = vrot.lane.b32.xlu0 %v184, 40
  %v536 = vpop.permute.xlu0 %535
  %537 = vrot.lane.b32.xlu0 %v185, 40
  %v538 = vpop.permute.xlu0 %537
  %571 = vrot.lane.b32.xlu0 %v187, 48
  %v572 = vpop.permute.xlu0 %571
  %573 = vrot.lane.b32.xlu0 %v188, 48
  %v574 = vpop.permute.xlu0 %573
  %575 = vrot.lane.b32.xlu0 %v189, 48
  %v576 = vpop.permute.xlu0 %575
  %577 = vrot.lane.b32.xlu0 %v190, 48
  %v578 = vpop.permute.xlu0 %577
  %579 = vrot.lane.b32.xlu0 %v191, 48
  %v580 = vpop.permute.xlu0 %579
  %581 = vrot.lane.b32.xlu0 %v192, 48
  %v582 = vpop.permute.xlu0 %581
  %583 = vrot.lane.b32.xlu0 %v193, 48
  %v584 = vpop.permute.xlu0 %583
  %585 = vrot.lane.b32.xlu0 %v194, 48
  %v586 = vpop.permute.xlu0 %585
  %587 = vrot.lane.b32.xlu0 %v195, 48
  %v588 = vpop.permute.xlu0 %587
  %589 = vrot.lane.b32.xlu0 %v196, 48
  %v590 = vpop.permute.xlu0 %589
  %591 = vrot.lane.b32.xlu0 %v197, 48
  %v592 = vpop.permute.xlu0 %591
  %593 = vrot.lane.b32.xlu0 %v198, 48
  %v594 = vpop.permute.xlu0 %593
  %595 = vrot.lane.b32.xlu0 %v199, 48
  %v596 = vpop.permute.xlu0 %595
  %597 = vrot.lane.b32.xlu0 %v200, 48
  %v598 = vpop.permute.xlu0 %597
  %599 = vrot.lane.b32.xlu0 %v201, 48
  %v600 = vpop.permute.xlu0 %599
  %601 = vrot.lane.b32.xlu0 %v202, 48
  %v602 = vpop.permute.xlu0 %601
  %635 = vrot.lane.b32.xlu0 %v203, 56
  %v636 = vpop.permute.xlu0 %635
  %637 = vrot.lane.b32.xlu0 %v204, 56
  %v638 = vpop.permute.xlu0 %637
  %639 = vrot.lane.b32.xlu0 %v205, 56
  %v640 = vpop.permute.xlu0 %639
  %641 = vrot.lane.b32.xlu0 %v206, 56
  %v642 = vpop.permute.xlu0 %641
  %643 = vrot.lane.b32.xlu0 %v207, 56
  %v644 = vpop.permute.xlu0 %643
  %645 = vrot.lane.b32.xlu0 %v208, 56
  %v646 = vpop.permute.xlu0 %645
  %647 = vrot.lane.b32.xlu0 %v209, 56
  %v648 = vpop.permute.xlu0 %647
  %649 = vrot.lane.b32.xlu0 %v210, 56
  %v650 = vpop.permute.xlu0 %649
  %651 = vrot.lane.b32.xlu0 %v211, 56
  %v652 = vpop.permute.xlu0 %651
  %653 = vrot.lane.b32.xlu0 %v212, 56
  %v654 = vpop.permute.xlu0 %653
  %655 = vrot.lane.b32.xlu0 %v213, 56
  %v656 = vpop.permute.xlu0 %655
  %657 = vrot.lane.b32.xlu0 %v214, 56
  %v658 = vpop.permute.xlu0 %657
  %659 = vrot.lane.b32.xlu0 %v215, 56
  %v660 = vpop.permute.xlu0 %659
  %661 = vrot.lane.b32.xlu0 %v216, 56
  %v662 = vpop.permute.xlu0 %661
  %663 = vrot.lane.b32.xlu0 %v217, 56
  %v664 = vpop.permute.xlu0 %663
  %665 = vrot.lane.b32.xlu0 %v218, 56
  %v666 = vpop.permute.xlu0 %665
  %699 = vrot.lane.b32.xlu0 %v219, 64
  %v700 = vpop.permute.xlu0 %699
  %701 = vrot.lane.b32.xlu0 %v220, 64
  %v702 = vpop.permute.xlu0 %701
  %703 = vrot.lane.b32.xlu0 %v221, 64
  %v704 = vpop.permute.xlu0 %703
  %705 = vrot.lane.b32.xlu0 %v222, 64
  %v706 = vpop.permute.xlu0 %705
  %707 = vrot.lane.b32.xlu0 %v223, 64
  %v708 = vpop.permute.xlu0 %707
  %709 = vrot.lane.b32.xlu0 %v224, 64
  %v710 = vpop.permute.xlu0 %709
  %711 = vrot.lane.b32.xlu0 %v225, 64
  %v712 = vpop.permute.xlu0 %711
  %713 = vrot.lane.b32.xlu0 %v226, 64
  %v714 = vpop.permute.xlu0 %713
  %715 = vrot.lane.b32.xlu0 %v227, 64
  %v716 = vpop.permute.xlu0 %715
  %717 = vrot.lane.b32.xlu0 %v228, 64
  %v718 = vpop.permute.xlu0 %717
  %719 = vrot.lane.b32.xlu0 %v229, 64
  %v720 = vpop.permute.xlu0 %719
  %721 = vrot.lane.b32.xlu0 %v230, 64
  %v722 = vpop.permute.xlu0 %721
  %723 = vrot.lane.b32.xlu0 %v231, 64
  %v724 = vpop.permute.xlu0 %723
  %725 = vrot.lane.b32.xlu0 %v232, 64
  %v726 = vpop.permute.xlu0 %725
  %727 = vrot.lane.b32.xlu0 %v233, 64
  %v728 = vpop.permute.xlu0 %727
  %729 = vrot.lane.b32.xlu0 %v234, 64
  %v730 = vpop.permute.xlu0 %729
  %v747 = vsel %vm14, %v90, %v252
  %v748 = vsel %vm14, %v91, %v254
  %v749 = vsel %vm14, %v92, %v256
  %v750 = vsel %vm14, %v93, %v258
  %v751 = vsel %vm14, %v94, %v260
  %v752 = vsel %vm14, %v95, %v262
  %v753 = vsel %vm14, %v96, %v264
  %v754 = vsel %vm14, %v97, %v266
  %v755 = vsel %vm14, %v98, %v268
  %v756 = vsel %vm14, %v99, %v270
  %v757 = vsel %vm14, %v100, %v272
  %v758 = vsel %vm14, %v101, %v274
  %v759 = vsel %vm14, %v102, %v276
  %v760 = vsel %vm14, %v103, %v278
  %v761 = vsel %vm14, %v104, %v280
  %v762 = vsel %vm14, %v105, %v282
  %vm763 = vcmask 130048
  %v764 = vsel %vm763, %v747, %v316
  %v765 = vsel %vm763, %v748, %v318
  %v766 = vsel %vm763, %v749, %v320
  %v767 = vsel %vm763, %v750, %v322
  %v768 = vsel %vm763, %v751, %v324
  %v769 = vsel %vm763, %v752, %v326
  %v770 = vsel %vm763, %v753, %v328
  %v771 = vsel %vm763, %v754, %v330
  %v772 = vsel %vm763, %v755, %v332
  %v773 = vsel %vm763, %v756, %v334
  %v774 = vsel %vm763, %v757, %v336
  %v775 = vsel %vm763, %v758, %v338
  %v776 = vsel %vm763, %v759, %v340
  %v777 = vsel %vm763, %v760, %v342
  %v778 = vsel %vm763, %v761, %v344
  %v779 = vsel %vm763, %v762, %v346
  %vm780 = vcmask 195584
  %v781 = vsel %vm780, %v764, %v380
  %v782 = vsel %vm780, %v765, %v382
  %v783 = vsel %vm780, %v766, %v384
  %v784 = vsel %vm780, %v767, %v386
  %v785 = vsel %vm780, %v768, %v388
  %v786 = vsel %vm780, %v769, %v390
  %v787 = vsel %vm780, %v770, %v392
  %v788 = vsel %vm780, %v771, %v394
  %v789 = vsel %vm780, %v772, %v396
  %v790 = vsel %vm780, %v773, %v398
  %v791 = vsel %vm780, %v774, %v400
  %v792 = vsel %vm780, %v775, %v402
  %v793 = vsel %vm780, %v776, %v404
  %v794 = vsel %vm780, %v777, %v406
  %v795 = vsel %vm780, %v778, %v408
  %v796 = vsel %vm780, %v779, %v410
  %vm797 = vcmask 261120
  %v798 = vsel %vm797, %v781, %v444
  %v799 = vsel %vm797, %v782, %v446
  %v800 = vsel %vm797, %v783, %v448
  %v801 = vsel %vm797, %v784, %v450
  %v802 = vsel %vm797, %v785, %v452
  %v803 = vsel %vm797, %v786, %v454
  %v804 = vsel %vm797, %v787, %v456
  %v805 = vsel %vm797, %v788, %v458
  %v806 = vsel %vm797, %v789, %v460
  %v807 = vsel %vm797, %v790, %v462
  %v808 = vsel %vm797, %v791, %v464
  %v809 = vsel %vm797, %v792, %v466
  %v810 = vsel %vm797, %v793, %v468
  %v811 = vsel %vm797, %v794, %v470
  %v812 = vsel %vm797, %v795, %v472
  %v813 = vsel %vm797, %v796, %v474
  %vm814 = vcmask 326656
  %v815 = vsel %vm814, %v798, %v508
  %v816 = vsel %vm814, %v799, %v510
  %v817 = vsel %vm814, %v800, %v512
  %v818 = vsel %vm814, %v801, %v514
  %v819 = vsel %vm814, %v802, %v516
  %v820 = vsel %vm814, %v803, %v518
  %v821 = vsel %vm814, %v804, %v520
  %v822 = vsel %vm814, %v805, %v522
  %v823 = vsel %vm814, %v806, %v524
  %v824 = vsel %vm814, %v807, %v526
  %v825 = vsel %vm814, %v808, %v528
  %v826 = vsel %vm814, %v809, %v530
  %v827 = vsel %vm814, %v810, %v532
  %v828 = vsel %vm814, %v811, %v534
  %v829 = vsel %vm814, %v812, %v536
  %v830 = vsel %vm814, %v813, %v538
  %vm831 = vcmask 392192
  %v832 = vsel %vm831, %v815, %v572
  %v833 = vsel %vm831, %v816, %v574
  %v834 = vsel %vm831, %v817, %v576
  %v835 = vsel %vm831, %v818, %v578
  %v836 = vsel %vm831, %v819, %v580
  %v837 = vsel %vm831, %v820, %v582
  %v838 = vsel %vm831, %v821, %v584
  %v839 = vsel %vm831, %v822, %v586
  %v840 = vsel %vm831, %v823, %v588
  %v841 = vsel %vm831, %v824, %v590
  %v842 = vsel %vm831, %v825, %v592
  %v843 = vsel %vm831, %v826, %v594
  %v844 = vsel %vm831, %v827, %v596
  %v845 = vsel %vm831, %v828, %v598
  %v846 = vsel %vm831, %v829, %v600
  %v847 = vsel %vm831, %v830, %v602
  %vm848 = vcmask 457728
  %v849 = vsel %vm848, %v832, %v636
  %v850 = vsel %vm848, %v833, %v638
  %v851 = vsel %vm848, %v834, %v640
  %v852 = vsel %vm848, %v835, %v642
  %v853 = vsel %vm848, %v836, %v644
  %v854 = vsel %vm848, %v837, %v646
  %v855 = vsel %vm848, %v838, %v648
  %v856 = vsel %vm848, %v839, %v650
  %v857 = vsel %vm848, %v840, %v652
  %v858 = vsel %vm848, %v841, %v654
  %v859 = vsel %vm848, %v842, %v656
  %v860 = vsel %vm848, %v843, %v658
  %v861 = vsel %vm848, %v844, %v660
  %v862 = vsel %vm848, %v845, %v662
  %v863 = vsel %vm848, %v846, %v664
  %v864 = vsel %vm848, %v847, %v666
  %vm865 = vcmask 523264
  %v866 = vsel %vm865, %v849, %v700
  %v867 = vsel %vm865, %v850, %v702
  %v868 = vsel %vm865, %v851, %v704
  %v869 = vsel %vm865, %v852, %v706
  %v870 = vsel %vm865, %v853, %v708
  %v871 = vsel %vm865, %v854, %v710
  %v872 = vsel %vm865, %v855, %v712
  %v873 = vsel %vm865, %v856, %v714
  %v874 = vsel %vm865, %v857, %v716
  %v875 = vsel %vm865, %v858, %v718
  %v876 = vsel %vm865, %v859, %v720
  %v877 = vsel %vm865, %v860, %v722
  %v878 = vsel %vm865, %v861, %v724
  %v879 = vsel %vm865, %v862, %v726
  %v880 = vsel %vm865, %v863, %v728
  %v881 = vsel %vm865, %v864, %v730
  %v882 = vld [vmem:[%s1] sm:$0xff]
  %v883 = vld [vmem:[%s1 + $0x8] sm:$0xff]
  %v884 = vld [vmem:[%s1 + $0x10] sm:$0xff]
  %v885 = vld [vmem:[%s1 + $0x18] sm:$0xff]
  %v886 = vld [vmem:[%s1 + $0x20] sm:$0xff]
  %v887 = vld [vmem:[%s1 + $0x28] sm:$0xff]
  %v888 = vld [vmem:[%s1 + $0x30] sm:$0xff]
  %v889 = vld [vmem:[%s1 + $0x38] sm:$0xff]
  %v890 = vld [vmem:[%s1 + $0x40] sm:$0xff]
  %v891 = vld [vmem:[%s2] sm:$0x1]
  %v892 = vlaneseq
  %v893 = vshrl.u32 %v892, 7
  %v894 = vsub.s32 0, %v893
  %v895 = vrot.slane %v891, %v894
  %vm896 = vcmask 588800
  %v898 = vsel %vm896, %v866, 0
  %v901 = vsel %vm896, %v867, 0
  %v904 = vsel %vm896, %v868, 0
  %v907 = vsel %vm896, %v869, 0
  %v910 = vsel %vm896, %v870, 0
  %v913 = vsel %vm896, %v871, 0
  %v916 = vsel %vm896, %v872, 0
  %v919 = vsel %vm896, %v873, 0
  %v922 = vsel %vm896, %v874, 0
  %v925 = vsel %vm896, %v875, 0
  %v928 = vsel %vm896, %v876, 0
  %v931 = vsel %vm896, %v877, 0
  %v934 = vsel %vm896, %v878, 0
  %v937 = vsel %vm896, %v879, 0
  %v940 = vsel %vm896, %v880, 0
  %v943 = vsel %vm896, %v881, 0
  %945 = vmatprep.subr.mxu0 0.0
  %946 = vmatpush1.msra.mxu0 %v882
  %947 = vmatprep.subr.mxu0 0.0
  %948 = vmatpush1.msra.mxu0 %v883
  %949 = vmatprep.subr.mxu0 0.0
  %950 = vmatpush1.msra.mxu0 %v884
  %951 = vmatprep.subr.mxu0 0.0
  %952 = vmatpush1.msra.mxu0 %v885
  %953 = vmatprep.subr.mxu0 0.0
  %954 = vmatpush1.msra.mxu0 %v886
  %955 = vmatprep.subr.mxu0 0.0
  %956 = vmatpush1.msra.mxu0 %v887
  %957 = vmatprep.subr.mxu0 0.0
  %958 = vmatpush1.msra.mxu0 %v888
  %959 = vmatprep.subr.mxu0 0.0
  %960 = vmatpush1.msra.mxu0 %v889
  %961 = vmatprep.subr.mxu0 0.0
  %962 = vmatpush1.msra.mxu0 %v890
  %963 = vmatprep.subr.mxu0 0.0
  %964 = vmatpush1.msra.mxu0 0.0
  %965 = vmatprep.subr.mxu0 0.0
  %966 = vmatpush1.msra.mxu0 0.0
  %967 = vmatprep.subr.mxu0 0.0
  %968 = vmatpush1.msra.mxu0 0.0
  %969 = vmatprep.subr.mxu0 0.0
  %970 = vmatpush1.msra.mxu0 0.0
  %971 = vmatprep.subr.mxu0 0.0
  %972 = vmatpush1.msra.mxu0 0.0
  %973 = vmatprep.subr.mxu0 0.0
  %974 = vmatpush1.msra.mxu0 0.0
  %975 = vmatprep.subr.mxu0 0.0
  %976 = vmatpush1.msra.mxu0 0.0
  %977 = vmatprep.subr.mxu0 0.0
  %978 = vmatpush1.msra.mxu0 0.0
  %979 = vmatprep.subr.mxu0 0.0
  %980 = vmatpush1.msra.mxu0 0.0
  %981 = vmatprep.subr.mxu0 0.0
  %982 = vmatpush1.msra.mxu0 0.0
  %983 = vmatprep.subr.mxu0 0.0
  %984 = vmatpush1.msra.mxu0 0.0
  %985 = vmatprep.subr.mxu0 0.0
  %986 = vmatpush1.msra.mxu0 0.0
  %987 = vmatprep.subr.mxu0 0.0
  %988 = vmatpush1.msra.mxu0 0.0
  %989 = vmatprep.subr.mxu0 0.0
  %990 = vmatpush1.msra.mxu0 0.0
  %991 = vmatprep.subr.mxu0 0.0
  %992 = vmatpush1.msra.mxu0 0.0
  %993 = vmatprep.subr.mxu0 0.0
  %994 = vmatpush1.msra.mxu0 0.0
  %995 = vmatprep.subr.mxu0 0.0
  %996 = vmatpush1.msra.mxu0 0.0
  %997 = vmatprep.subr.mxu0 0.0
  %998 = vmatpush1.msra.mxu0 0.0
  %999 = vmatprep.subr.mxu0 0.0
  %1000 = vmatpush1.msra.mxu0 0.0
  %1001 = vmatprep.subr.mxu0 0.0
  %1002 = vmatpush1.msra.mxu0 0.0
  %1003 = vmatprep.subr.mxu0 0.0
  %1004 = vmatpush1.msra.mxu0 0.0
  %1005 = vmatprep.subr.mxu0 0.0
  %1006 = vmatpush1.msra.mxu0 0.0
  %1007 = vmatprep.subr.mxu0 0.0
  %1008 = vmatpush1.msra.mxu0 0.0
  %1009 = vmatprep.mubr.f32.mxu0 0.0
  %1010 = vmatmul.mubr.f32.gmra.mrb[0].mxu0 %v898
  %v1011 = vpop.f32.mrb[0].mxu0
  %v1012 = vadd.f32 %v895, %v1011
  %v1013 = vpop.f32.mrb[0].mxu0
  %1014 = vmatprep.mubr.f32.mxu0 0.0
  %1015 = vmatmul.mubr.f32.gmra.mrb[0].mxu0 %v901
  %v1016 = vpop.f32.mrb[0].mxu0
  %v1017 = vadd.f32 %v895, %v1016
  %v1018 = vpop.f32.mrb[0].mxu0
  %1019 = vmatprep.mubr.f32.mxu0 0.0
  %1020 = vmatmul.mubr.f32.gmra.mrb[0].mxu0 %v904
  %v1021 = vpop.f32.mrb[0].mxu0
  %v1022 = vadd.f32 %v895, %v1021
  %v1023 = vpop.f32.mrb[0].mxu0
  %1024 = vmatprep.mubr.f32.mxu0 0.0
  %1025 = vmatmul.mubr.f32.gmra.mrb[0].mxu0 %v907
  %v1026 = vpop.f32.mrb[0].mxu0
  %v1027 = vadd.f32 %v895, %v1026
  %v1028 = vpop.f32.mrb[0].mxu0
  %1029 = vmatprep.mubr.f32.mxu0 0.0
  %1030 = vmatmul.mubr.f32.gmra.mrb[0].mxu0 %v910
  %v1031 = vpop.f32.mrb[0].mxu0
  %v1032 = vadd.f32 %v895, %v1031
  %v1033 = vpop.f32.mrb[0].mxu0
  %1034 = vmatprep.mubr.f32.mxu0 0.0
  %1035 = vmatmul.mubr.f32.gmra.mrb[0].mxu0 %v913
  %v1036 = vpop.f32.mrb[0].mxu0
  %v1037 = vadd.f32 %v895, %v1036
  %v1038 = vpop.f32.mrb[0].mxu0
  %1039 = vmatprep.mubr.f32.mxu0 0.0
  %1040 = vmatmul.mubr.f32.gmra.mrb[0].mxu0 %v916
  %v1041 = vpop.f32.mrb[0].mxu0
  %v1042 = vadd.f32 %v895, %v1041
  %v1043 = vpop.f32.mrb[0].mxu0
  %1044 = vmatprep.mubr.f32.mxu0 0.0
  %1045 = vmatmul.mubr.f32.gmra.mrb[0].mxu0 %v919
  %v1046 = vpop.f32.mrb[0].mxu0
  %v1047 = vadd.f32 %v895, %v1046
  %v1048 = vpop.f32.mrb[0].mxu0
  %1049 = vmatprep.mubr.f32.mxu0 0.0
  %1050 = vmatmul.mubr.f32.gmra.mrb[0].mxu0 %v922
  %v1051 = vpop.f32.mrb[0].mxu0
  %v1052 = vadd.f32 %v895, %v1051
  %v1053 = vpop.f32.mrb[0].mxu0
  %1054 = vmatprep.mubr.f32.mxu0 0.0
  %1055 = vmatmul.mubr.f32.gmra.mrb[0].mxu0 %v925
  %v1056 = vpop.f32.mrb[0].mxu0
  %v1057 = vadd.f32 %v895, %v1056
  %v1058 = vpop.f32.mrb[0].mxu0
  %1059 = vmatprep.mubr.f32.mxu0 0.0
  %1060 = vmatmul.mubr.f32.gmra.mrb[0].mxu0 %v928
  %v1061 = vpop.f32.mrb[0].mxu0
  %v1062 = vadd.f32 %v895, %v1061
  %v1063 = vpop.f32.mrb[0].mxu0
  %1064 = vmatprep.mubr.f32.mxu0 0.0
  %1065 = vmatmul.mubr.f32.gmra.mrb[0].mxu0 %v931
  %v1066 = vpop.f32.mrb[0].mxu0
  %v1067 = vadd.f32 %v895, %v1066
  %v1068 = vpop.f32.mrb[0].mxu0
  %1069 = vmatprep.mubr.f32.mxu0 0.0
  %1070 = vmatmul.mubr.f32.gmra.mrb[0].mxu0 %v934
  %v1071 = vpop.f32.mrb[0].mxu0
  %v1072 = vadd.f32 %v895, %v1071
  %v1073 = vpop.f32.mrb[0].mxu0
  %1074 = vmatprep.mubr.f32.mxu0 0.0
  %1075 = vmatmul.mubr.f32.gmra.mrb[0].mxu0 %v937
  %v1076 = vpop.f32.mrb[0].mxu0
  %v1077 = vadd.f32 %v895, %v1076
  %v1078 = vpop.f32.mrb[0].mxu0
  %1079 = vmatprep.mubr.f32.mxu0 0.0
  %1080 = vmatmul.mubr.f32.gmra.mrb[0].mxu0 %v940
  %v1081 = vpop.f32.mrb[0].mxu0
  %v1082 = vadd.f32 %v895, %v1081
  %v1083 = vpop.f32.mrb[0].mxu0
  %1084 = vmatprep.mubr.f32.mxu0 0.0
  %1085 = vmatmul.mubr.f32.gmra.mrb[0].mxu0 %v943
  %v1086 = vpop.f32.mrb[0].mxu0
  %v1087 = vadd.f32 %v895, %v1086
  %v1088 = vpop.f32.mrb[0].mxu0
  %1089 = vdwg.mxu0
  %v1090 = vmax.f32 %v1012, 0.0
  %v1091 = vmax.f32 %v1017, 0.0
  %v1092 = vmax.f32 %v1022, 0.0
  %v1093 = vmax.f32 %v1027, 0.0
  %v1094 = vmax.f32 %v1032, 0.0
  %v1095 = vmax.f32 %v1037, 0.0
  %v1096 = vmax.f32 %v1042, 0.0
  %v1097 = vmax.f32 %v1047, 0.0
  %v1098 = vmax.f32 %v1052, 0.0
  %v1099 = vmax.f32 %v1057, 0.0
  %v1100 = vmax.f32 %v1062, 0.0
  %v1101 = vmax.f32 %v1067, 0.0
  %v1102 = vmax.f32 %v1072, 0.0
  %v1103 = vmax.f32 %v1077, 0.0
  %v1104 = vmax.f32 %v1082, 0.0
  %v1105 = vmax.f32 %v1087, 0.0
  %v1106 = vmax.f32 %v1090, %v1091
  %v1107 = vmax.f32 %v1092, %v1093
  %v1108 = vmax.f32 %v1094, %v1095
  %v1109 = vmax.f32 %v1096, %v1097
  %v1110 = vmax.f32 %v1098, %v1099
  %v1111 = vmax.f32 %v1100, %v1101
  %v1112 = vmax.f32 %v1102, %v1103
  %v1113 = vmax.f32 %v1104, %v1105
  %1114 = vst.msk [vmem:[#allocation3] sm:$0xff] %vm763, 0.0
  %vm1115 = vcmask 123904
  %1116 = vst.msk [vmem:[#allocation3 + $0x8] sm:$0x3] %vm1115, 0.0
  %1117 = vst.msk [vmem:[#allocation3 + $0x10] sm:$0xff] %vm763, 0.0
  %1118 = vst.msk [vmem:[#allocation3 + $0x18] sm:$0x3] %vm1115, 0.0
  %1119 = vst.msk [vmem:[#allocation3 + $0x20] sm:$0xff] %vm763, 0.0
  %1120 = vst.msk [vmem:[#allocation3 + $0x28] sm:$0x3] %vm1115, 0.0
  %1121 = vst.msk [vmem:[#allocation3 + $0x30] sm:$0xff] %vm763, 0.0
  %1122 = vst.msk [vmem:[#allocation3 + $0x38] sm:$0x3] %vm1115, 0.0
  %1123 = vst.msk [vmem:[#allocation3 + $0x40] sm:$0xff] %vm763, 0.0
  %1124 = vst.msk [vmem:[#allocation3 + $0x48] sm:$0x3] %vm1115, 0.0
  %1125 = vst.msk [vmem:[#allocation3 + $0x50] sm:$0xff] %vm763, 0.0
  %1126 = vst.msk [vmem:[#allocation3 + $0x58] sm:$0x3] %vm1115, 0.0
  %1127 = vst.msk [vmem:[#allocation3 + $0x60] sm:$0xff] %vm763, 0.0
  %1128 = vst.msk [vmem:[#allocation3 + $0x68] sm:$0x3] %vm1115, 0.0
  %1129 = vst.msk [vmem:[#allocation3 + $0x70] sm:$0xff] %vm763, 0.0
  %1130 = vst.msk [vmem:[#allocation3 + $0x78] sm:$0x3] %vm1115, 0.0
  %1131 = vst.msk [vmem:[#allocation3 + $0x80] sm:$0xff] %vm763, 0.0
  %1132 = vst.msk [vmem:[#allocation3 + $0x88] sm:$0x3] %vm1115, 0.0
  %1133 = vst.msk [vmem:[#allocation3 + $0x90] sm:$0xff] %vm763, 0.0
  %1134 = vst.msk [vmem:[#allocation3 + $0x98] sm:$0x3] %vm1115, 0.0
  %1135 = vst.msk [vmem:[#allocation3 + $0xa0] sm:$0xff] %vm763, 0.0
  %1136 = vst.msk [vmem:[#allocation3 + $0xa8] sm:$0x3] %vm1115, 0.0
  %1137 = vst.msk [vmem:[#allocation3 + $0xb0] sm:$0xff] %vm763, 0.0
  %1138 = vst.msk [vmem:[#allocation3 + $0xb8] sm:$0x3] %vm1115, 0.0
  %v1147 = vrot.slane %v1106, 1
  %v1148 = vrot.slane %v1107, 1
  %v1149 = vrot.slane %v1108, 1
  %v1150 = vrot.slane %v1109, 1
  %v1151 = vrot.slane %v1110, 1
  %v1152 = vrot.slane %v1111, 1
  %v1153 = vrot.slane %v1112, 1
  %v1154 = vrot.slane %v1113, 1
  %v1163 = vmax.f32 %v1106, %v1147
  %v1164 = vmax.f32 %v1107, %v1148
  %v1165 = vmax.f32 %v1108, %v1149
  %v1166 = vmax.f32 %v1109, %v1150
  %v1167 = vmax.f32 %v1110, %v1151
  %v1168 = vmax.f32 %v1111, %v1152
  %v1169 = vmax.f32 %v1112, %v1153
  %v1170 = vmax.f32 %v1113, %v1154
  %s1171 = scalar_lea.vmem [#allocation3], 16
  %vm1172 = vcmask 122880
  %1173 = vst.msk [vmem:[%s1171 + $0x1] sm:$0x1] %vm1172, %v1163
  %1174 = vst.msk [vmem:[%s1171 + $0x11] sm:$0x1] %vm1172, %v1164
  %1175 = vst.msk [vmem:[%s1171 + $0x21] sm:$0x1] %vm1172, %v1165
  %1176 = vst.msk [vmem:[%s1171 + $0x31] sm:$0x1] %vm1172, %v1166
  %1177 = vst.msk [vmem:[%s1171 + $0x61] sm:$0x1] %vm1172, %v1167
  %1178 = vst.msk [vmem:[%s1171 + $0x71] sm:$0x1] %vm1172, %v1168
  %1179 = vst.msk [vmem:[%s1171 + $0x81] sm:$0x1] %vm1172, %v1169
  %1180 = vst.msk [vmem:[%s1171 + $0x91] sm:$0x1] %vm1172, %v1170
  %vm1181 = vcmask 124930
  %1182 = vst.msk [vmem:[%s1171] sm:$0x4] %vm1181, %v1163
  %1183 = vst.msk [vmem:[%s1171 + $0x10] sm:$0x4] %vm1181, %v1164
  %1184 = vst.msk [vmem:[%s1171 + $0x20] sm:$0x4] %vm1181, %v1165
  %1185 = vst.msk [vmem:[%s1171 + $0x30] sm:$0x4] %vm1181, %v1166
  %1186 = vst.msk [vmem:[%s1171 + $0x60] sm:$0x4] %vm1181, %v1167
  %1187 = vst.msk [vmem:[%s1171 + $0x70] sm:$0x4] %vm1181, %v1168
  %1188 = vst.msk [vmem:[%s1171 + $0x80] sm:$0x4] %vm1181, %v1169
  %1189 = vst.msk [vmem:[%s1171 + $0x90] sm:$0x4] %vm1181, %v1170
  %vm1190 = vcmask 126980
  %1191 = vst.msk [vmem:[%s1171 - $0x1] sm:$0x10] %vm1190, %v1163
  %1192 = vst.msk [vmem:[%s1171 + $0xf] sm:$0x10] %vm1190, %v1164
  %1193 = vst.msk [vmem:[%s1171 + $0x1f] sm:$0x10] %vm1190, %v1165
  %1194 = vst.msk [vmem:[%s1171 + $0x2f] sm:$0x10] %vm1190, %v1166
  %1195 = vst.msk [vmem:[%s1171 + $0x5f] sm:$0x10] %vm1190, %v1167
  %1196 = vst.msk [vmem:[%s1171 + $0x6f] sm:$0x10] %vm1190, %v1168
  %1197 = vst.msk [vmem:[%s1171 + $0x7f] sm:$0x10] %vm1190, %v1169
  %1198 = vst.msk [vmem:[%s1171 + $0x8f] sm:$0x10] %vm1190, %v1170
  %vm1199 = vcmask 129030
  %1200 = vst.msk [vmem:[%s1171 - $0x2] sm:$0x40] %vm1199, %v1163
  %1201 = vst.msk [vmem:[%s1171 + $0xe] sm:$0x40] %vm1199, %v1164
  %1202 = vst.msk [vmem:[%s1171 + $0x1e] sm:$0x40] %vm1199, %v1165
  %1203 = vst.msk [vmem:[%s1171 + $0x2e] sm:$0x40] %vm1199, %v1166
  %1204 = vst.msk [vmem:[%s1171 + $0x5e] sm:$0x40] %vm1199, %v1167
  %1205 = vst.msk [vmem:[%s1171 + $0x6e] sm:$0x40] %vm1199, %v1168
  %1206 = vst.msk [vmem:[%s1171 + $0x7e] sm:$0x40] %vm1199, %v1169
  %1207 = vst.msk [vmem:[%s1171 + $0x8e] sm:$0x40] %vm1199, %v1170
  %v1208 = vld [vmem:[#allocation3] sm:$0xff]
  %v1209 = vld [vmem:[#allocation3 + $0x10] sm:$0xff]
  %v1210 = vld [vmem:[#allocation3 + $0x20] sm:$0xff]
  %v1211 = vld [vmem:[#allocation3 + $0x30] sm:$0xff]
  %v1212 = vld [vmem:[#allocation3 + $0x60] sm:$0xff]
  %v1213 = vld [vmem:[#allocation3 + $0x70] sm:$0xff]
  %v1214 = vld [vmem:[#allocation3 + $0x80] sm:$0xff]
  %v1215 = vld [vmem:[#allocation3 + $0x90] sm:$0xff]
  %v1216 = vld [vmem:[#allocation3 + $0x1] sm:$0xff]
  %v1217 = vld [vmem:[#allocation3 + $0x11] sm:$0xff]
  %v1218 = vld [vmem:[#allocation3 + $0x21] sm:$0xff]
  %v1219 = vld [vmem:[#allocation3 + $0x31] sm:$0xff]
  %v1220 = vld [vmem:[#allocation3 + $0x61] sm:$0xff]
  %v1221 = vld [vmem:[#allocation3 + $0x71] sm:$0xff]
  %v1222 = vld [vmem:[#allocation3 + $0x81] sm:$0xff]
  %v1223 = vld [vmem:[#allocation3 + $0x91] sm:$0xff]
  %v1224 = vld [vmem:[#allocation3 + $0x2] sm:$0xff]
  %v1225 = vld [vmem:[#allocation3 + $0x12] sm:$0xff]
  %v1226 = vld [vmem:[#allocation3 + $0x22] sm:$0xff]
  %v1227 = vld [vmem:[#allocation3 + $0x32] sm:$0xff]
  %v1228 = vld [vmem:[#allocation3 + $0x62] sm:$0xff]
  %v1229 = vld [vmem:[#allocation3 + $0x72] sm:$0xff]
  %v1230 = vld [vmem:[#allocation3 + $0x82] sm:$0xff]
  %v1231 = vld [vmem:[#allocation3 + $0x92] sm:$0xff]
  %v1232 = vld [vmem:[%s1171] sm:$0xff]
  %v1233 = vld [vmem:[%s1171 + $0x10] sm:$0xff]
  %v1234 = vld [vmem:[%s1171 + $0x20] sm:$0xff]
  %v1235 = vld [vmem:[%s1171 + $0x30] sm:$0xff]
  %v1236 = vld [vmem:[%s1171 + $0x60] sm:$0xff]
  %v1237 = vld [vmem:[%s1171 + $0x70] sm:$0xff]
  %v1238 = vld [vmem:[%s1171 + $0x80] sm:$0xff]
  %v1239 = vld [vmem:[%s1171 + $0x90] sm:$0xff]
  %v1240 = vld [vmem:[%s1171 + $0x1] sm:$0xff]
  %v1241 = vld [vmem:[%s1171 + $0x11] sm:$0xff]
  %v1242 = vld [vmem:[%s1171 + $0x21] sm:$0xff]
  %v1243 = vld [vmem:[%s1171 + $0x31] sm:$0xff]
  %v1244 = vld [vmem:[%s1171 + $0x61] sm:$0xff]
  %v1245 = vld [vmem:[%s1171 + $0x71] sm:$0xff]
  %v1246 = vld [vmem:[%s1171 + $0x81] sm:$0xff]
  %v1247 = vld [vmem:[%s1171 + $0x91] sm:$0xff]
  %v1248 = vld [vmem:[%s1171 + $0x2] sm:$0xff]
  %v1249 = vld [vmem:[%s1171 + $0x12] sm:$0xff]
  %v1250 = vld [vmem:[%s1171 + $0x22] sm:$0xff]
  %v1251 = vld [vmem:[%s1171 + $0x32] sm:$0xff]
  %v1252 = vld [vmem:[%s1171 + $0x62] sm:$0xff]
  %v1253 = vld [vmem:[%s1171 + $0x72] sm:$0xff]
  %v1254 = vld [vmem:[%s1171 + $0x82] sm:$0xff]
  %v1255 = vld [vmem:[%s1171 + $0x92] sm:$0xff]
  %s1256 = scalar_lea.vmem [#allocation3], 32
  %v1257 = vld [vmem:[%s1256] sm:$0xff]
  %v1258 = vld [vmem:[%s1256 + $0x10] sm:$0xff]
  %v1259 = vld [vmem:[%s1256 + $0x20] sm:$0xff]
  %v1260 = vld [vmem:[%s1256 + $0x30] sm:$0xff]
  %v1261 = vld [vmem:[%s1256 + $0x60] sm:$0xff]
  %v1262 = vld [vmem:[%s1256 + $0x70] sm:$0xff]
  %v1263 = vld [vmem:[%s1256 + $0x80] sm:$0xff]
  %v1264 = vld [vmem:[%s1256 + $0x90] sm:$0xff]
  %v1265 = vld [vmem:[%s1256 + $0x1] sm:$0xff]
  %v1266 = vld [vmem:[%s1256 + $0x11] sm:$0xff]
  %v1267 = vld [vmem:[%s1256 + $0x21] sm:$0xff]
  %v1268 = vld [vmem:[%s1256 + $0x31] sm:$0xff]
  %v1269 = vld [vmem:[%s1256 + $0x61] sm:$0xff]
  %v1270 = vld [vmem:[%s1256 + $0x71] sm:$0xff]
  %v1271 = vld [vmem:[%s1256 + $0x81] sm:$0xff]
  %v1272 = vld [vmem:[%s1256 + $0x91] sm:$0xff]
  %v1273 = vld [vmem:[%s1256 + $0x2] sm:$0xff]
  %v1274 = vld [vmem:[%s1256 + $0x12] sm:$0xff]
  %v1275 = vld [vmem:[%s1256 + $0x22] sm:$0xff]
  %v1276 = vld [vmem:[%s1256 + $0x32] sm:$0xff]
  %v1277 = vld [vmem:[%s1256 + $0x62] sm:$0xff]
  %v1278 = vld [vmem:[%s1256 + $0x72] sm:$0xff]
  %v1279 = vld [vmem:[%s1256 + $0x82] sm:$0xff]
  %v1280 = vld [vmem:[%s1256 + $0x92] sm:$0xff]
  %1289 = vrot.lane.b32.xlu0 %v1216, 16
  %v1290 = vpop.permute.xlu0 %1289
  %1291 = vrot.lane.b32.xlu0 %v1217, 16
  %v1292 = vpop.permute.xlu0 %1291
  %1293 = vrot.lane.b32.xlu0 %v1218, 16
  %v1294 = vpop.permute.xlu0 %1293
  %1295 = vrot.lane.b32.xlu0 %v1219, 16
  %v1296 = vpop.permute.xlu0 %1295
  %1297 = vrot.lane.b32.xlu0 %v1220, 16
  %v1298 = vpop.permute.xlu0 %1297
  %1299 = vrot.lane.b32.xlu0 %v1221, 16
  %v1300 = vpop.permute.xlu0 %1299
  %1301 = vrot.lane.b32.xlu0 %v1222, 16
  %v1302 = vpop.permute.xlu0 %1301
  %1303 = vrot.lane.b32.xlu0 %v1223, 16
  %v1304 = vpop.permute.xlu0 %1303
  %1321 = vrot.lane.b32.xlu0 %v1224, 32
  %v1322 = vpop.permute.xlu0 %1321
  %1323 = vrot.lane.b32.xlu0 %v1225, 32
  %v1324 = vpop.permute.xlu0 %1323
  %1325 = vrot.lane.b32.xlu0 %v1226, 32
  %v1326 = vpop.permute.xlu0 %1325
  %1327 = vrot.lane.b32.xlu0 %v1227, 32
  %v1328 = vpop.permute.xlu0 %1327
  %1329 = vrot.lane.b32.xlu0 %v1228, 32
  %v1330 = vpop.permute.xlu0 %1329
  %1331 = vrot.lane.b32.xlu0 %v1229, 32
  %v1332 = vpop.permute.xlu0 %1331
  %1333 = vrot.lane.b32.xlu0 %v1230, 32
  %v1334 = vpop.permute.xlu0 %1333
  %1335 = vrot.lane.b32.xlu0 %v1231, 32
  %v1336 = vpop.permute.xlu0 %1335
  %1353 = vrot.lane.b32.xlu0 %v1232, 48
  %v1354 = vpop.permute.xlu0 %1353
  %1355 = vrot.lane.b32.xlu0 %v1233, 48
  %v1356 = vpop.permute.xlu0 %1355
  %1357 = vrot.lane.b32.xlu0 %v1234, 48
  %v1358 = vpop.permute.xlu0 %1357
  %1359 = vrot.lane.b32.xlu0 %v1235, 48
  %v1360 = vpop.permute.xlu0 %1359
  %1361 = vrot.lane.b32.xlu0 %v1236, 48
  %v1362 = vpop.permute.xlu0 %1361
  %1363 = vrot.lane.b32.xlu0 %v1237, 48
  %v1364 = vpop.permute.xlu0 %1363
  %1365 = vrot.lane.b32.xlu0 %v1238, 48
  %v1366 = vpop.permute.xlu0 %1365
  %1367 = vrot.lane.b32.xlu0 %v1239, 48
  %v1368 = vpop.permute.xlu0 %1367
  %1385 = vrot.lane.b32.xlu0 %v1240, 64
  %v1386 = vpop.permute.xlu0 %1385
  %1387 = vrot.lane.b32.xlu0 %v1241, 64
  %v1388 = vpop.permute.xlu0 %1387
  %1389 = vrot.lane.b32.xlu0 %v1242, 64
  %v1390 = vpop.permute.xlu0 %1389
  %1391 = vrot.lane.b32.xlu0 %v1243, 64
  %v1392 = vpop.permute.xlu0 %1391
  %1393 = vrot.lane.b32.xlu0 %v1244, 64
  %v1394 = vpop.permute.xlu0 %1393
  %1395 = vrot.lane.b32.xlu0 %v1245, 64
  %v1396 = vpop.permute.xlu0 %1395
  %1397 = vrot.lane.b32.xlu0 %v1246, 64
  %v1398 = vpop.permute.xlu0 %1397
  %1399 = vrot.lane.b32.xlu0 %v1247, 64
  %v1400 = vpop.permute.xlu0 %1399
  %1417 = vrot.lane.b32.xlu0 %v1248, 80
  %v1418 = vpop.permute.xlu0 %1417
  %1419 = vrot.lane.b32.xlu0 %v1249, 80
  %v1420 = vpop.permute.xlu0 %1419
  %1421 = vrot.lane.b32.xlu0 %v1250, 80
  %v1422 = vpop.permute.xlu0 %1421
  %1423 = vrot.lane.b32.xlu0 %v1251, 80
  %v1424 = vpop.permute.xlu0 %1423
  %1425 = vrot.lane.b32.xlu0 %v1252, 80
  %v1426 = vpop.permute.xlu0 %1425
  %1427 = vrot.lane.b32.xlu0 %v1253, 80
  %v1428 = vpop.permute.xlu0 %1427
  %1429 = vrot.lane.b32.xlu0 %v1254, 80
  %v1430 = vpop.permute.xlu0 %1429
  %1431 = vrot.lane.b32.xlu0 %v1255, 80
  %v1432 = vpop.permute.xlu0 %1431
  %1449 = vrot.lane.b32.xlu0 %v1257, 96
  %v1450 = vpop.permute.xlu0 %1449
  %1451 = vrot.lane.b32.xlu0 %v1258, 96
  %v1452 = vpop.permute.xlu0 %1451
  %1453 = vrot.lane.b32.xlu0 %v1259, 96
  %v1454 = vpop.permute.xlu0 %1453
  %1455 = vrot.lane.b32.xlu0 %v1260, 96
  %v1456 = vpop.permute.xlu0 %1455
  %1457 = vrot.lane.b32.xlu0 %v1261, 96
  %v1458 = vpop.permute.xlu0 %1457
  %1459 = vrot.lane.b32.xlu0 %v1262, 96
  %v1460 = vpop.permute.xlu0 %1459
  %1461 = vrot.lane.b32.xlu0 %v1263, 96
  %v1462 = vpop.permute.xlu0 %1461
  %1463 = vrot.lane.b32.xlu0 %v1264, 96
  %v1464 = vpop.permute.xlu0 %1463
  %1481 = vrot.lane.b32.xlu0 %v1265, 112
  %v1482 = vpop.permute.xlu0 %1481
  %1483 = vrot.lane.b32.xlu0 %v1266, 112
  %v1484 = vpop.permute.xlu0 %1483
  %1485 = vrot.lane.b32.xlu0 %v1267, 112
  %v1486 = vpop.permute.xlu0 %1485
  %1487 = vrot.lane.b32.xlu0 %v1268, 112
  %v1488 = vpop.permute.xlu0 %1487
  %1489 = vrot.lane.b32.xlu0 %v1269, 112
  %v1490 = vpop.permute.xlu0 %1489
  %1491 = vrot.lane.b32.xlu0 %v1270, 112
  %v1492 = vpop.permute.xlu0 %1491
  %1493 = vrot.lane.b32.xlu0 %v1271, 112
  %v1494 = vpop.permute.xlu0 %1493
  %1495 = vrot.lane.b32.xlu0 %v1272, 112
  %v1496 = vpop.permute.xlu0 %1495
  %v1505 = vsel %vm763, %v1208, %v1290
  %v1506 = vsel %vm763, %v1209, %v1292
  %v1507 = vsel %vm763, %v1210, %v1294
  %v1508 = vsel %vm763, %v1211, %v1296
  %v1509 = vsel %vm763, %v1212, %v1298
  %v1510 = vsel %vm763, %v1213, %v1300
  %v1511 = vsel %vm763, %v1214, %v1302
  %v1512 = vsel %vm763, %v1215, %v1304
  %v1513 = vsel %vm797, %v1505, %v1322
  %v1514 = vsel %vm797, %v1506, %v1324
  %v1515 = vsel %vm797, %v1507, %v1326
  %v1516 = vsel %vm797, %v1508, %v1328
  %v1517 = vsel %vm797, %v1509, %v1330
  %v1518 = vsel %vm797, %v1510, %v1332
  %v1519 = vsel %vm797, %v1511, %v1334
  %v1520 = vsel %vm797, %v1512, %v1336
  %v1521 = vsel %vm831, %v1513, %v1354
  %v1522 = vsel %vm831, %v1514, %v1356
  %v1523 = vsel %vm831, %v1515, %v1358
  %v1524 = vsel %vm831, %v1516, %v1360
  %v1525 = vsel %vm831, %v1517, %v1362
  %v1526 = vsel %vm831, %v1518, %v1364
  %v1527 = vsel %vm831, %v1519, %v1366
  %v1528 = vsel %vm831, %v1520, %v1368
  %v1529 = vsel %vm865, %v1521, %v1386
  %v1530 = vsel %vm865, %v1522, %v1388
  %v1531 = vsel %vm865, %v1523, %v1390
  %v1532 = vsel %vm865, %v1524, %v1392
  %v1533 = vsel %vm865, %v1525, %v1394
  %v1534 = vsel %vm865, %v1526, %v1396
  %v1535 = vsel %vm865, %v1527, %v1398
  %v1536 = vsel %vm865, %v1528, %v1400
  %vm1537 = vcmask 654336
  %v1538 = vsel %vm1537, %v1529, %v1418
  %v1539 = vsel %vm1537, %v1530, %v1420
  %v1540 = vsel %vm1537, %v1531, %v1422
  %v1541 = vsel %vm1537, %v1532, %v1424
  %v1542 = vsel %vm1537, %v1533, %v1426
  %v1543 = vsel %vm1537, %v1534, %v1428
  %v1544 = vsel %vm1537, %v1535, %v1430
  %v1545 = vsel %vm1537, %v1536, %v1432
  %vm1546 = vcmask 785408
  %v1547 = vsel %vm1546, %v1538, %v1450
  %v1548 = vsel %vm1546, %v1539, %v1452
  %v1549 = vsel %vm1546, %v1540, %v1454
  %v1550 = vsel %vm1546, %v1541, %v1456
  %v1551 = vsel %vm1546, %v1542, %v1458
  %v1552 = vsel %vm1546, %v1543, %v1460
  %v1553 = vsel %vm1546, %v1544, %v1462
  %v1554 = vsel %vm1546, %v1545, %v1464
  %vm1555 = vcmask 916480
  %v1556 = vsel %vm1555, %v1547, %v1482
  %v1557 = vsel %vm1555, %v1548, %v1484
  %v1558 = vsel %vm1555, %v1549, %v1486
  %v1559 = vsel %vm1555, %v1550, %v1488
  %v1560 = vsel %vm1555, %v1551, %v1490
  %v1561 = vsel %vm1555, %v1552, %v1492
  %v1562 = vsel %vm1555, %v1553, %v1494
  %v1563 = vsel %vm1555, %v1554, %v1496
  %v1564 = vld [vmem:[%s1 + $0x48] sm:$0xff]
  %v1565 = vld [vmem:[%s1 + $0x50] sm:$0xff]
  %v1566 = vld [vmem:[%s1 + $0x58] sm:$0xff]
  %v1567 = vld [vmem:[%s1 + $0x60] sm:$0xff]
  %v1568 = vld [vmem:[%s1 + $0x68] sm:$0xff]
  %v1569 = vld [vmem:[%s1 + $0x70] sm:$0xff]
  %v1570 = vld [vmem:[%s1 + $0x78] sm:$0xff]
  %v1571 = vld [vmem:[%s1 + $0x80] sm:$0xff]
  %v1572 = vld [vmem:[%s1 + $0x88] sm:$0xff]
  %v1573 = vld [vmem:[%s1 + $0x90] sm:$0xff]
  %v1574 = vld [vmem:[%s1 + $0x98] sm:$0xff]
  %v1575 = vld [vmem:[%s1 + $0xa0] sm:$0xff]
  %v1576 = vld [vmem:[%s1 + $0xa8] sm:$0xff]
  %v1577 = vld [vmem:[%s1 + $0xb0] sm:$0xff]
  %v1578 = vld [vmem:[%s1 + $0xb8] sm:$0xff]
  %v1579 = vld [vmem:[%s1 + $0xc0] sm:$0xff]
  %v1580 = vld [vmem:[%s1 + $0xc8] sm:$0xff]
  %v1581 = vld [vmem:[%s1 + $0xd0] sm:$0xff]
  %v1582 = vld [vmem:[%s2 + $0x1] sm:$0x1]
  %v1583 = vlaneseq
  %v1584 = vshrl.u32 %v1583, 7
  %v1585 = vsub.s32 0, %v1584
  %v1586 = vrot.slane %v1582, %v1585
  %v1588 = vsel %vm763, %v1273, 0
  %v1591 = vsel %vm763, %v1274, 0
  %v1594 = vsel %vm763, %v1275, 0
  %v1597 = vsel %vm763, %v1276, 0
  %v1600 = vsel %vm763, %v1277, 0
  %v1603 = vsel %vm763, %v1278, 0
  %v1606 = vsel %vm763, %v1279, 0
  %v1609 = vsel %vm763, %v1280, 0
  %1611 = vmatprep.subr.mxu0 0.0
  %1612 = vmatpush1.msra.mxu0 %v1564
  %1613 = vmatprep.subr.mxu0 0.0
  %1614 = vmatpush1.msra.mxu0 %v1565
  %1615 = vmatprep.subr.mxu0 0.0
  %1616 = vmatpush1.msra.mxu0 %v1566
  %1617 = vmatprep.subr.mxu0 0.0
  %1618 = vmatpush1.msra.mxu0 %v1567
  %1619 = vmatprep.subr.mxu0 0.0
  %1620 = vmatpush1.msra.mxu0 %v1568
  %1621 = vmatprep.subr.mxu0 0.0
  %1622 = vmatpush1.msra.mxu0 %v1569
  %1623 = vmatprep.subr.mxu0 0.0
  %1624 = vmatpush1.msra.mxu0 %v1570
  %1625 = vmatprep.subr.mxu0 0.0
  %1626 = vmatpush1.msra.mxu0 %v1571
  %1627 = vmatprep.subr.mxu0 0.0
  %1628 = vmatpush1.msra.mxu0 %v1572
  %1629 = vmatprep.subr.mxu0 0.0
  %1630 = vmatpush1.msra.mxu0 %v1573
  %1631 = vmatprep.subr.mxu0 0.0
  %1632 = vmatpush1.msra.mxu0 %v1574
  %1633 = vmatprep.subr.mxu0 0.0
  %1634 = vmatpush1.msra.mxu0 %v1575
  %1635 = vmatprep.subr.mxu0 0.0
  %1636 = vmatpush1.msra.mxu0 %v1576
  %1637 = vmatprep.subr.mxu0 0.0
  %1638 = vmatpush1.msra.mxu0 %v1577
  %1639 = vmatprep.subr.mxu0 0.0
  %1640 = vmatpush1.msra.mxu0 %v1578
  %1641 = vmatprep.subr.mxu0 0.0
  %1642 = vmatpush1.msra.mxu0 %v1579
  %1643 = vmatprep.subr.mxu0 0.0
  %1644 = vmatpush1.msra.mxu0 %v1580
  %1645 = vmatprep.subr.mxu0 0.0
  %1646 = vmatpush1.msra.mxu0 %v1581
  %1647 = vmatprep.subr.mxu0 0.0
  %1648 = vmatpush1.msra.mxu0 0.0
  %1649 = vmatprep.subr.mxu0 0.0
  %1650 = vmatpush1.msra.mxu0 0.0
  %1651 = vmatprep.subr.mxu0 0.0
  %1652 = vmatpush1.msra.mxu0 0.0
  %1653 = vmatprep.subr.mxu0 0.0
  %1654 = vmatpush1.msra.mxu0 0.0
  %1655 = vmatprep.subr.mxu0 0.0
  %1656 = vmatpush1.msra.mxu0 0.0
  %1657 = vmatprep.subr.mxu0 0.0
  %1658 = vmatpush1.msra.mxu0 0.0
  %1659 = vmatprep.subr.mxu0 0.0
  %1660 = vmatpush1.msra.mxu0 0.0
  %1661 = vmatprep.subr.mxu0 0.0
  %1662 = vmatpush1.msra.mxu0 0.0
  %1663 = vmatprep.subr.mxu0 0.0
  %1664 = vmatpush1.msra.mxu0 0.0
  %1665 = vmatprep.subr.mxu0 0.0
  %1666 = vmatpush1.msra.mxu0 0.0
  %1667 = vmatprep.subr.mxu0 0.0
  %1668 = vmatpush1.msra.mxu0 0.0
  %1669 = vmatprep.subr.mxu0 0.0
  %1670 = vmatpush1.msra.mxu0 0.0
  %1671 = vmatprep.subr.mxu0 0.0
  %1672 = vmatpush1.msra.mxu0 0.0
  %1673 = vmatprep.subr.mxu0 0.0
  %1674 = vmatpush1.msra.mxu0 0.0
  %1675 = vmatprep.mubr.f32.mxu0 %v1588
  %1676 = vmatmul.mubr.f32.gmra.mrb[0].mxu0 %v1556
  %v1677 = vpop.f32.mrb[0].mxu0
  %v1678 = vadd.f32 %v1586, %v1677
  %v1679 = vpop.f32.mrb[0].mxu0
  %1680 = vmatprep.mubr.f32.mxu0 %v1591
  %1681 = vmatmul.mubr.f32.gmra.mrb[0].mxu0 %v1557
  %v1682 = vpop.f32.mrb[0].mxu0
  %v1683 = vadd.f32 %v1586, %v1682
  %v1684 = vpop.f32.mrb[0].mxu0
  %1685 = vmatprep.mubr.f32.mxu0 %v1594
  %1686 = vmatmul.mubr.f32.gmra.mrb[0].mxu0 %v1558
  %v1687 = vpop.f32.mrb[0].mxu0
  %v1688 = vadd.f32 %v1586, %v1687
  %v1689 = vpop.f32.mrb[0].mxu0
  %1690 = vmatprep.mubr.f32.mxu0 %v1597
  %1691 = vmatmul.mubr.f32.gmra.mrb[0].mxu0 %v1559
  %v1692 = vpop.f32.mrb[0].mxu0
  %v1693 = vadd.f32 %v1586, %v1692
  %v1694 = vpop.f32.mrb[0].mxu0
  %1695 = vmatprep.mubr.f32.mxu0 %v1600
  %1696 = vmatmul.mubr.f32.gmra.mrb[0].mxu0 %v1560
  %v1697 = vpop.f32.mrb[0].mxu0
  %v1698 = vadd.f32 %v1586, %v1697
  %v1699 = vpop.f32.mrb[0].mxu0
  %1700 = vmatprep.mubr.f32.mxu0 %v1603
  %1701 = vmatmul.mubr.f32.gmra.mrb[0].mxu0 %v1561
  %v1702 = vpop.f32.mrb[0].mxu0
  %v1703 = vadd.f32 %v1586, %v1702
  %v1704 = vpop.f32.mrb[0].mxu0
  %1705 = vmatprep.mubr.f32.mxu0 %v1606
  %1706 = vmatmul.mubr.f32.gmra.mrb[0].mxu0 %v1562
  %v1707 = vpop.f32.mrb[0].mxu0
  %v1708 = vadd.f32 %v1586, %v1707
  %v1709 = vpop.f32.mrb[0].mxu0
  %1710 = vmatprep.mubr.f32.mxu0 %v1609
  %1711 = vmatmul.mubr.f32.gmra.mrb[0].mxu0 %v1563
  %v1712 = vpop.f32.mrb[0].mxu0
  %v1713 = vadd.f32 %v1586, %v1712
  %v1714 = vpop.f32.mrb[0].mxu0
  %1715 = vdwg.mxu0
  %v1716 = vmax.f32 %v1678, 0.0
  %v1717 = vmax.f32 %v1683, 0.0
  %v1718 = vmax.f32 %v1688, 0.0
  %v1719 = vmax.f32 %v1693, 0.0
  %v1720 = vmax.f32 %v1698, 0.0
  %v1721 = vmax.f32 %v1703, 0.0
  %v1722 = vmax.f32 %v1708, 0.0
  %v1723 = vmax.f32 %v1713, 0.0
  %v1724 = vmax.f32 %v1716, %v1717
  %v1725 = vmax.f32 %v1718, %v1719
  %v1726 = vmax.f32 %v1720, %v1721
  %v1727 = vmax.f32 %v1722, %v1723
  %1728 = vst.msk [vmem:[#allocation4] sm:$0xff] %vm797, 0.0
  %vm1729 = vcmask 254976
  %1730 = vst.msk [vmem:[#allocation4 + $0x8] sm:$0x3] %vm1729, 0.0
  %1731 = vst.msk [vmem:[#allocation4 + $0x10] sm:$0xff] %vm797, 0.0
  %1732 = vst.msk [vmem:[#allocation4 + $0x18] sm:$0x3] %vm1729, 0.0
  %1733 = vst.msk [vmem:[#allocation4 + $0x20] sm:$0xff] %vm797, 0.0
  %1734 = vst.msk [vmem:[#allocation4 + $0x28] sm:$0x3] %vm1729, 0.0
  %1735 = vst.msk [vmem:[#allocation4 + $0x30] sm:$0xff] %vm797, 0.0
  %1736 = vst.msk [vmem:[#allocation4 + $0x38] sm:$0x3] %vm1729, 0.0
  %1737 = vst.msk [vmem:[#allocation4 + $0x40] sm:$0xff] %vm797, 0.0
  %1738 = vst.msk [vmem:[#allocation4 + $0x48] sm:$0x3] %vm1729, 0.0
  %1739 = vst.msk [vmem:[#allocation4 + $0x50] sm:$0xff] %vm797, 0.0
  %1740 = vst.msk [vmem:[#allocation4 + $0x58] sm:$0x3] %vm1729, 0.0
  %1741 = vst.msk [vmem:[#allocation4 + $0x60] sm:$0xff] %vm797, 0.0
  %1742 = vst.msk [vmem:[#allocation4 + $0x68] sm:$0x3] %vm1729, 0.0
  %1743 = vst.msk [vmem:[#allocation4 + $0x70] sm:$0xff] %vm797, 0.0
  %1744 = vst.msk [vmem:[#allocation4 + $0x78] sm:$0x3] %vm1729, 0.0
  %v1749 = vrot.slane %v1724, 1
  %v1750 = vrot.slane %v1725, 1
  %v1751 = vrot.slane %v1726, 1
  %v1752 = vrot.slane %v1727, 1
  %v1757 = vmax.f32 %v1724, %v1749
  %v1758 = vmax.f32 %v1725, %v1750
  %v1759 = vmax.f32 %v1726, %v1751
  %v1760 = vmax.f32 %v1727, %v1752
  %s1761 = scalar_lea.vmem [#allocation4], 16
  %vm1762 = vcmask 253952
  %1763 = vst.msk [vmem:[%s1761 + $0x1] sm:$0x1] %vm1762, %v1757
  %1764 = vst.msk [vmem:[%s1761 + $0x11] sm:$0x1] %vm1762, %v1758
  %1765 = vst.msk [vmem:[%s1761 + $0x41] sm:$0x1] %vm1762, %v1759
  %1766 = vst.msk [vmem:[%s1761 + $0x51] sm:$0x1] %vm1762, %v1760
  %vm1767 = vcmask 256002
  %1768 = vst.msk [vmem:[%s1761] sm:$0x4] %vm1767, %v1757
  %1769 = vst.msk [vmem:[%s1761 + $0x10] sm:$0x4] %vm1767, %v1758
  %1770 = vst.msk [vmem:[%s1761 + $0x40] sm:$0x4] %vm1767, %v1759
  %1771 = vst.msk [vmem:[%s1761 + $0x50] sm:$0x4] %vm1767, %v1760
  %v1772 = vld [vmem:[#allocation4] sm:$0xff]
  %v1773 = vld [vmem:[#allocation4 + $0x10] sm:$0xff]
  %v1774 = vld [vmem:[#allocation4 + $0x40] sm:$0xff]
  %v1775 = vld [vmem:[#allocation4 + $0x50] sm:$0xff]
  %v1776 = vld [vmem:[#allocation4 + $0x1] sm:$0xff]
  %v1777 = vld [vmem:[#allocation4 + $0x11] sm:$0xff]
  %v1778 = vld [vmem:[#allocation4 + $0x41] sm:$0xff]
  %v1779 = vld [vmem:[#allocation4 + $0x51] sm:$0xff]
  %v1780 = vld [vmem:[#allocation4 + $0x2] sm:$0xff]
  %v1781 = vld [vmem:[#allocation4 + $0x12] sm:$0xff]
  %v1782 = vld [vmem:[#allocation4 + $0x42] sm:$0xff]
  %v1783 = vld [vmem:[#allocation4 + $0x52] sm:$0xff]
  %v1784 = vld [vmem:[%s1761] sm:$0xff]
  %v1785 = vld [vmem:[%s1761 + $0x10] sm:$0xff]
  %v1786 = vld [vmem:[%s1761 + $0x40] sm:$0xff]
  %v1787 = vld [vmem:[%s1761 + $0x50] sm:$0xff]
  %v1788 = vld [vmem:[%s1761 + $0x1] sm:$0xff]
  %v1789 = vld [vmem:[%s1761 + $0x11] sm:$0xff]
  %v1790 = vld [vmem:[%s1761 + $0x41] sm:$0xff]
  %v1791 = vld [vmem:[%s1761 + $0x51] sm:$0xff]
  %v1792 = vld [vmem:[%s1761 + $0x2] sm:$0xff]
  %v1793 = vld [vmem:[%s1761 + $0x12] sm:$0xff]
  %v1794 = vld [vmem:[%s1761 + $0x42] sm:$0xff]
  %v1795 = vld [vmem:[%s1761 + $0x52] sm:$0xff]
  %s1796 = scalar_lea.vmem [#allocation4], 32
  %v1797 = vld [vmem:[%s1796] sm:$0xff]
  %v1798 = vld [vmem:[%s1796 + $0x10] sm:$0xff]
  %v1799 = vld [vmem:[%s1796 + $0x40] sm:$0xff]
  %v1800 = vld [vmem:[%s1796 + $0x50] sm:$0xff]
  %v1801 = vld [vmem:[%s1796 + $0x1] sm:$0xff]
  %v1802 = vld [vmem:[%s1796 + $0x11] sm:$0xff]
  %v1803 = vld [vmem:[%s1796 + $0x41] sm:$0xff]
  %v1804 = vld [vmem:[%s1796 + $0x51] sm:$0xff]
  %v1805 = vld [vmem:[%s1796 + $0x2] sm:$0xff]
  %v1806 = vld [vmem:[%s1796 + $0x12] sm:$0xff]
  %v1807 = vld [vmem:[%s1796 + $0x42] sm:$0xff]
  %v1808 = vld [vmem:[%s1796 + $0x52] sm:$0xff]
  %1813 = vrot.lane.b32.xlu0 %v1776, 32
  %v1814 = vpop.permute.xlu0 %1813
  %1815 = vrot.lane.b32.xlu0 %v1777, 32
  %v1816 = vpop.permute.xlu0 %1815
  %1817 = vrot.lane.b32.xlu0 %v1778, 32
  %v1818 = vpop.permute.xlu0 %1817
  %1819 = vrot.lane.b32.xlu0 %v1779, 32
  %v1820 = vpop.permute.xlu0 %1819
  %1829 = vrot.lane.b32.xlu0 %v1780, 64
  %v1830 = vpop.permute.xlu0 %1829
  %1831 = vrot.lane.b32.xlu0 %v1781, 64
  %v1832 = vpop.permute.xlu0 %1831
  %1833 = vrot.lane.b32.xlu0 %v1782, 64
  %v1834 = vpop.permute.xlu0 %1833
  %1835 = vrot.lane.b32.xlu0 %v1783, 64
  %v1836 = vpop.permute.xlu0 %1835
  %1845 = vrot.lane.b32.xlu0 %v1784, 96
  %v1846 = vpop.permute.xlu0 %1845
  %1847 = vrot.lane.b32.xlu0 %v1785, 96
  %v1848 = vpop.permute.xlu0 %1847
  %1849 = vrot.lane.b32.xlu0 %v1786, 96
  %v1850 = vpop.permute.xlu0 %1849
  %1851 = vrot.lane.b32.xlu0 %v1787, 96
  %v1852 = vpop.permute.xlu0 %1851
  %1861 = vrot.lane.b32.xlu0 %v1792, 32
  %v1862 = vpop.permute.xlu0 %1861
  %1863 = vrot.lane.b32.xlu0 %v1793, 32
  %v1864 = vpop.permute.xlu0 %1863
  %1865 = vrot.lane.b32.xlu0 %v1794, 32
  %v1866 = vpop.permute.xlu0 %1865
  %1867 = vrot.lane.b32.xlu0 %v1795, 32
  %v1868 = vpop.permute.xlu0 %1867
  %1877 = vrot.lane.b32.xlu0 %v1797, 64
  %v1878 = vpop.permute.xlu0 %1877
  %1879 = vrot.lane.b32.xlu0 %v1798, 64
  %v1880 = vpop.permute.xlu0 %1879
  %1881 = vrot.lane.b32.xlu0 %v1799, 64
  %v1882 = vpop.permute.xlu0 %1881
  %1883 = vrot.lane.b32.xlu0 %v1800, 64
  %v1884 = vpop.permute.xlu0 %1883
  %1893 = vrot.lane.b32.xlu0 %v1801, 96
  %v1894 = vpop.permute.xlu0 %1893
  %1895 = vrot.lane.b32.xlu0 %v1802, 96
  %v1896 = vpop.permute.xlu0 %1895
  %1897 = vrot.lane.b32.xlu0 %v1803, 96
  %v1898 = vpop.permute.xlu0 %1897
  %1899 = vrot.lane.b32.xlu0 %v1804, 96
  %v1900 = vpop.permute.xlu0 %1899
  %v1905 = vsel %vm797, %v1772, %v1814
  %v1906 = vsel %vm797, %v1773, %v1816
  %v1907 = vsel %vm797, %v1774, %v1818
  %v1908 = vsel %vm797, %v1775, %v1820
  %v1909 = vsel %vm865, %v1905, %v1830
  %v1910 = vsel %vm865, %v1906, %v1832
  %v1911 = vsel %vm865, %v1907, %v1834
  %v1912 = vsel %vm865, %v1908, %v1836
  %v1913 = vsel %vm1546, %v1909, %v1846
  %v1914 = vsel %vm1546, %v1910, %v1848
  %v1915 = vsel %vm1546, %v1911, %v1850
  %v1916 = vsel %vm1546, %v1912, %v1852
  %v1917 = vsel %vm797, %v1788, %v1862
  %v1918 = vsel %vm797, %v1789, %v1864
  %v1919 = vsel %vm797, %v1790, %v1866
  %v1920 = vsel %vm797, %v1791, %v1868
  %v1921 = vsel %vm865, %v1917, %v1878
  %v1922 = vsel %vm865, %v1918, %v1880
  %v1923 = vsel %vm865, %v1919, %v1882
  %v1924 = vsel %vm865, %v1920, %v1884
  %v1925 = vsel %vm1546, %v1921, %v1894
  %v1926 = vsel %vm1546, %v1922, %v1896
  %v1927 = vsel %vm1546, %v1923, %v1898
  %v1928 = vsel %vm1546, %v1924, %v1900
  %v1929 = vld [vmem:[%s1 + $0xd8] sm:$0xff]
  %v1930 = vld [vmem:[%s1 + $0xe0] sm:$0xff]
  %v1931 = vld [vmem:[%s1 + $0xe8] sm:$0xff]
  %v1932 = vld [vmem:[%s1 + $0xf0] sm:$0xff]
  %v1933 = vld [vmem:[%s1 + $0xf8] sm:$0xff]
  %v1934 = vld [vmem:[%s1 + $0x100] sm:$0xff]
  %v1935 = vld [vmem:[%s1 + $0x108] sm:$0xff]
  %v1936 = vld [vmem:[%s1 + $0x110] sm:$0xff]
  %v1937 = vld [vmem:[%s1 + $0x118] sm:$0xff]
  %v1938 = vld [vmem:[%s1 + $0x120] sm:$0xff]
  %v1939 = vld [vmem:[%s1 + $0x128] sm:$0xff]
  %v1940 = vld [vmem:[%s1 + $0x130] sm:$0xff]
  %v1941 = vld [vmem:[%s1 + $0x138] sm:$0xff]
  %v1942 = vld [vmem:[%s1 + $0x140] sm:$0xff]
  %v1943 = vld [vmem:[%s1 + $0x148] sm:$0xff]
  %v1944 = vld [vmem:[%s1 + $0x150] sm:$0xff]
  %v1945 = vld [vmem:[%s1 + $0x158] sm:$0xff]
  %v1946 = vld [vmem:[%s1 + $0x160] sm:$0xff]
  %v1947 = vld [vmem:[%s1 + $0x168] sm:$0xff]
  %v1948 = vld [vmem:[%s1 + $0x170] sm:$0xff]
  %v1949 = vld [vmem:[%s1 + $0x178] sm:$0xff]
  %v1950 = vld [vmem:[%s1 + $0x180] sm:$0xff]
  %v1951 = vld [vmem:[%s1 + $0x188] sm:$0xff]
  %v1952 = vld [vmem:[%s1 + $0x190] sm:$0xff]
  %v1953 = vld [vmem:[%s1 + $0x198] sm:$0xff]
  %v1954 = vld [vmem:[%s1 + $0x1a0] sm:$0xff]
  %v1955 = vld [vmem:[%s1 + $0x1a8] sm:$0xff]
  %v1956 = vld [vmem:[%s1 + $0x1b0] sm:$0xff]
  %v1957 = vld [vmem:[%s1 + $0x1b8] sm:$0xff]
  %v1958 = vld [vmem:[%s1 + $0x1c0] sm:$0xff]
  %v1959 = vld [vmem:[%s1 + $0x1c8] sm:$0xff]
  %v1960 = vld [vmem:[%s1 + $0x1d0] sm:$0xff]
  %v1961 = vld [vmem:[%s1 + $0x1d8] sm:$0xff]
  %v1962 = vld [vmem:[%s1 + $0x1e0] sm:$0xff]
  %v1963 = vld [vmem:[%s1 + $0x1e8] sm:$0xff]
  %v1964 = vld [vmem:[%s1 + $0x1f0] sm:$0xff]
  %v1965 = vld [vmem:[%s2 + $0x2] sm:$0x1]
  %v1966 = vlaneseq
  %v1967 = vshrl.u32 %v1966, 7
  %v1968 = vsub.s32 0, %v1967
  %v1969 = vrot.slane %v1965, %v1968
  %v1971 = vsel %vm797, %v1805, 0
  %v1974 = vsel %vm797, %v1806, 0
  %v1977 = vsel %vm797, %v1807, 0
  %v1980 = vsel %vm797, %v1808, 0
  %1982 = vmatprep.subr.mxu0 0.0
  %1983 = vmatpush1.msra.mxu0 %v1929
  %1984 = vmatprep.subr.mxu0 0.0
  %1985 = vmatpush1.msra.mxu0 %v1930
  %1986 = vmatprep.subr.mxu0 0.0
  %1987 = vmatpush1.msra.mxu0 %v1931
  %1988 = vmatprep.subr.mxu0 0.0
  %1989 = vmatpush1.msra.mxu0 %v1932
  %1990 = vmatprep.subr.mxu0 0.0
  %1991 = vmatpush1.msra.mxu0 %v1933
  %1992 = vmatprep.subr.mxu0 0.0
  %1993 = vmatpush1.msra.mxu0 %v1934
  %1994 = vmatprep.subr.mxu0 0.0
  %1995 = vmatpush1.msra.mxu0 %v1935
  %1996 = vmatprep.subr.mxu0 0.0
  %1997 = vmatpush1.msra.mxu0 %v1936
  %1998 = vmatprep.subr.mxu0 0.0
  %1999 = vmatpush1.msra.mxu0 %v1937
  %2000 = vmatprep.subr.mxu0 0.0
  %2001 = vmatpush1.msra.mxu0 %v1938
  %2002 = vmatprep.subr.mxu0 0.0
  %2003 = vmatpush1.msra.mxu0 %v1939
  %2004 = vmatprep.subr.mxu0 0.0
  %2005 = vmatpush1.msra.mxu0 %v1940
  %2006 = vmatprep.subr.mxu0 0.0
  %2007 = vmatpush1.msra.mxu0 %v1941
  %2008 = vmatprep.subr.mxu0 0.0
  %2009 = vmatpush1.msra.mxu0 %v1942
  %2010 = vmatprep.subr.mxu0 0.0
  %2011 = vmatpush1.msra.mxu0 %v1943
  %2012 = vmatprep.subr.mxu0 0.0
  %2013 = vmatpush1.msra.mxu0 %v1944
  %2014 = vmatprep.subr.mxu0 0.0
  %2015 = vmatpush1.msra.mxu0 %v1945
  %2016 = vmatprep.subr.mxu0 0.0
  %2017 = vmatpush1.msra.mxu0 %v1946
  %2018 = vmatprep.subr.mxu0 0.0
  %2019 = vmatpush1.msra.mxu0 %v1947
  %2020 = vmatprep.subr.mxu0 0.0
  %2021 = vmatpush1.msra.mxu0 %v1948
  %2022 = vmatprep.subr.mxu0 0.0
  %2023 = vmatpush1.msra.mxu0 %v1949
  %2024 = vmatprep.subr.mxu0 0.0
  %2025 = vmatpush1.msra.mxu0 %v1950
  %2026 = vmatprep.subr.mxu0 0.0
  %2027 = vmatpush1.msra.mxu0 %v1951
  %2028 = vmatprep.subr.mxu0 0.0
  %2029 = vmatpush1.msra.mxu0 %v1952
  %2030 = vmatprep.subr.mxu0 0.0
  %2031 = vmatpush1.msra.mxu0 %v1953
  %2032 = vmatprep.subr.mxu0 0.0
  %2033 = vmatpush1.msra.mxu0 %v1954
  %2034 = vmatprep.subr.mxu0 0.0
  %2035 = vmatpush1.msra.mxu0 %v1955
  %2036 = vmatprep.subr.mxu0 0.0
  %2037 = vmatpush1.msra.mxu0 %v1956
  %2038 = vmatprep.subr.mxu0 0.0
  %2039 = vmatpush1.msra.mxu0 %v1957
  %2040 = vmatprep.subr.mxu0 0.0
  %2041 = vmatpush1.msra.mxu0 %v1958
  %2042 = vmatprep.subr.mxu0 0.0
  %2043 = vmatpush1.msra.mxu0 %v1959
  %2044 = vmatprep.subr.mxu0 0.0
  %2045 = vmatpush1.msra.mxu0 %v1960
  %2046 = vmatprep.mubr.f32.mxu0 %v1925
  %2047 = vmatmul.mubr.f32.gmra.mrb[0].mxu0 %v1913
  %v2048 = vpop.f32.mrb[0].mxu0
  %v2049 = vadd.f32 %v1969, %v2048
  %v2050 = vpop.f32.mrb[0].mxu0
  %2051 = vmatprep.mubr.f32.mxu0 %v1926
  %2052 = vmatmul.mubr.f32.gmra.mrb[0].mxu0 %v1914
  %v2053 = vpop.f32.mrb[0].mxu0
  %v2054 = vadd.f32 %v1969, %v2053
  %v2055 = vpop.f32.mrb[0].mxu0
  %2056 = vmatprep.mubr.f32.mxu0 %v1927
  %2057 = vmatmul.mubr.f32.gmra.mrb[0].mxu0 %v1915
  %v2058 = vpop.f32.mrb[0].mxu0
  %v2059 = vadd.f32 %v1969, %v2058
  %v2060 = vpop.f32.mrb[0].mxu0
  %2061 = vmatprep.mubr.f32.mxu0 %v1928
  %2062 = vmatmul.mubr.f32.gmra.mrb[0].mxu0 %v1916
  %v2063 = vpop.f32.mrb[0].mxu0
  %v2064 = vadd.f32 %v1969, %v2063
  %v2065 = vpop.f32.mrb[0].mxu0
  %2066 = vdwg.mxu0
  %2067 = vmatprep.subr.mxu0 0.0
  %2068 = vmatpush1.msra.mxu0 %v1961
  %2069 = vmatprep.subr.mxu0 0.0
  %2070 = vmatpush1.msra.mxu0 %v1962
  %2071 = vmatprep.subr.mxu0 0.0
  %2072 = vmatpush1.msra.mxu0 %v1963
  %2073 = vmatprep.subr.mxu0 0.0
  %2074 = vmatpush1.msra.mxu0 %v1964
  %2075 = vmatprep.subr.mxu0 0.0
  %2076 = vmatpush1.msra.mxu0 0.0
  %2077 = vmatprep.subr.mxu0 0.0
  %2078 = vmatpush1.msra.mxu0 0.0
  %2079 = vmatprep.subr.mxu0 0.0
  %2080 = vmatpush1.msra.mxu0 0.0
  %2081 = vmatprep.subr.mxu0 0.0
  %2082 = vmatpush1.msra.mxu0 0.0
  %2083 = vmatprep.subr.mxu0 0.0
  %2084 = vmatpush1.msra.mxu0 0.0
  %2085 = vmatprep.subr.mxu0 0.0
  %2086 = vmatpush1.msra.mxu0 0.0
  %2087 = vmatprep.subr.mxu0 0.0
  %2088 = vmatpush1.msra.mxu0 0.0
  %2089 = vmatprep.subr.mxu0 0.0
  %2090 = vmatpush1.msra.mxu0 0.0
  %2091 = vmatprep.subr.mxu0 0.0
  %2092 = vmatpush1.msra.mxu0 0.0
  %2093 = vmatprep.subr.mxu0 0.0
  %2094 = vmatpush1.msra.mxu0 0.0
  %2095 = vmatprep.subr.mxu0 0.0
  %2096 = vmatpush1.msra.mxu0 0.0
  %2097 = vmatprep.subr.mxu0 0.0
  %2098 = vmatpush1.msra.mxu0 0.0
  %2099 = vmatprep.subr.mxu0 0.0
  %2100 = vmatpush1.msra.mxu0 0.0
  %2101 = vmatprep.subr.mxu0 0.0
  %2102 = vmatpush1.msra.mxu0 0.0
  %2103 = vmatprep.subr.mxu0 0.0
  %2104 = vmatpush1.msra.mxu0 0.0
  %2105 = vmatprep.subr.mxu0 0.0
  %2106 = vmatpush1.msra.mxu0 0.0
  %2107 = vmatprep.subr.mxu0 0.0
  %2108 = vmatpush1.msra.mxu0 0.0
  %2109 = vmatprep.subr.mxu0 0.0
  %2110 = vmatpush1.msra.mxu0 0.0
  %2111 = vmatprep.subr.mxu0 0.0
  %2112 = vmatpush1.msra.mxu0 0.0
  %2113 = vmatprep.subr.mxu0 0.0
  %2114 = vmatpush1.msra.mxu0 0.0
  %2115 = vmatprep.subr.mxu0 0.0
  %2116 = vmatpush1.msra.mxu0 0.0
  %2117 = vmatprep.subr.mxu0 0.0
  %2118 = vmatpush1.msra.mxu0 0.0
  %2119 = vmatprep.subr.mxu0 0.0
  %2120 = vmatpush1.msra.mxu0 0.0
  %2121 = vmatprep.subr.mxu0 0.0
  %2122 = vmatpush1.msra.mxu0 0.0
  %2123 = vmatprep.subr.mxu0 0.0
  %2124 = vmatpush1.msra.mxu0 0.0
  %2125 = vmatprep.subr.mxu0 0.0
  %2126 = vmatpush1.msra.mxu0 0.0
  %2127 = vmatprep.subr.mxu0 0.0
  %2128 = vmatpush1.msra.mxu0 0.0
  %2129 = vmatprep.subr.mxu0 0.0
  %2130 = vmatpush1.msra.mxu0 0.0
  %2131 = vmatprep.mubr.f32.mxu0 0.0
  %2132 = vmatmul.mubr.f32.gmra.mrb[0].mxu0 %v1971
  %v2133 = vpop.f32.mrb[0].mxu0
  %v2134 = vadd.f32 %v2049, %v2133
  %v2135 = vpop.f32.mrb[0].mxu0
  %2136 = vmatprep.mubr.f32.mxu0 0.0
  %2137 = vmatmul.mubr.f32.gmra.mrb[0].mxu0 %v1974
  %v2138 = vpop.f32.mrb[0].mxu0
  %v2139 = vadd.f32 %v2054, %v2138
  %v2140 = vpop.f32.mrb[0].mxu0
  %2141 = vmatprep.mubr.f32.mxu0 0.0
  %2142 = vmatmul.mubr.f32.gmra.mrb[0].mxu0 %v1977
  %v2143 = vpop.f32.mrb[0].mxu0
  %v2144 = vadd.f32 %v2059, %v2143
  %v2145 = vpop.f32.mrb[0].mxu0
  %2146 = vmatprep.mubr.f32.mxu0 0.0
  %2147 = vmatmul.mubr.f32.gmra.mrb[0].mxu0 %v1980
  %v2148 = vpop.f32.mrb[0].mxu0
  %v2149 = vadd.f32 %v2064, %v2148
  %v2150 = vpop.f32.mrb[0].mxu0
  %2151 = vdwg.mxu0
  %v2152 = vmax.f32 %v2134, 0.0
  %v2153 = vmax.f32 %v2139, 0.0
  %v2154 = vmax.f32 %v2144, 0.0
  %v2155 = vmax.f32 %v2149, 0.0
  %v2156 = vmax.f32 %v2152, %v2153
  %v2157 = vmax.f32 %v2154, %v2155
  %vm2158 = vcmask 517120
  %v2159 = vsel %vm2158, %v2156, -inf
  %v2160 = vrot.slane %v2159, 4
  %v2161 = vmax.f32 %v2159, %v2160
  %v2162 = vrot.slane %v2161, 2
  %v2163 = vmax.f32 %v2161, %v2162
  %v2164 = vrot.slane %v2163, 1
  %v2165 = vmax.f32 %v2163, %v2164
  %v2166 = vsel %vm2158, %v2157, -inf
  %v2167 = vrot.slane %v2166, 4
  %v2168 = vmax.f32 %v2166, %v2167
  %v2169 = vrot.slane %v2168, 2
  %v2170 = vmax.f32 %v2168, %v2169
  %v2171 = vrot.slane %v2170, 1
  %v2172 = vmax.f32 %v2170, %v2171
  %v2173 = vld [vmem:[%s1 + $0x1f8] sm:$0xff]
  %v2174 = vld [vmem:[%s1 + $0x200] sm:$0xff]
  %v2175 = vld [vmem:[%s1 + $0x208] sm:$0xff]
  %v2176 = vld [vmem:[%s1 + $0x210] sm:$0xff]
  %v2177 = vld [vmem:[%s1 + $0x218] sm:$0xff]
  %v2178 = vld [vmem:[%s1 + $0x220] sm:$0xff]
  %v2179 = vld [vmem:[%s1 + $0x228] sm:$0xff]
  %v2180 = vld [vmem:[%s1 + $0x230] sm:$0xff]
  %v2181 = vld [vmem:[%s2 + $0x3] sm:$0x1]
  %v2182 = vld [vmem:[%s2 + $0x4] sm:$0x1]
  %v2183 = vld [vmem:[%s2 + $0x5] sm:$0x1]
  %v2184 = vlaneseq
  %v2185 = vshrl.u32 %v2184, 7
  %v2186 = vsub.s32 0, %v2185
  %v2187 = vrot.slane %v2181, %v2186
  %vm2190 = vcmask 1041409
  %v2191 = vsel %vm2190, %v2172, %v2165
  %v2192 = vsel %vm865, %v2191, 0
  %2194 = vmatprep.subr.mxu0 0.0
  %2195 = vmatpush1.msra.mxu0 %v2173
  %2196 = vmatprep.subr.mxu0 0.0
  %2197 = vmatpush1.msra.mxu0 %v2174
  %2198 = vmatprep.subr.mxu0 0.0
  %2199 = vmatpush1.msra.mxu0 %v2175
  %2200 = vmatprep.subr.mxu0 0.0
  %2201 = vmatpush1.msra.mxu0 %v2176
  %2202 = vmatprep.subr.mxu0 0.0
  %2203 = vmatpush1.msra.mxu0 %v2177
  %2204 = vmatprep.subr.mxu0 0.0
  %2205 = vmatpush1.msra.mxu0 %v2178
  %2206 = vmatprep.subr.mxu0 0.0
  %2207 = vmatpush1.msra.mxu0 %v2179
  %2208 = vmatprep.subr.mxu0 0.0
  %2209 = vmatpush1.msra.mxu0 %v2180
  %2210 = vmatprep.subr.mxu0 0.0
  %2211 = vmatpush1.msra.mxu0 0.0
  %2212 = vmatprep.subr.mxu0 0.0
  %2213 = vmatpush1.msra.mxu0 0.0
  %2214 = vmatprep.subr.mxu0 0.0
  %2215 = vmatpush1.msra.mxu0 0.0
  %2216 = vmatprep.subr.mxu0 0.0
  %2217 = vmatpush1.msra.mxu0 0.0
  %2218 = vmatprep.subr.mxu0 0.0
  %2219 = vmatpush1.msra.mxu0 0.0
  %2220 = vmatprep.subr.mxu0 0.0
  %2221 = vmatpush1.msra.mxu0 0.0
  %2222 = vmatprep.subr.mxu0 0.0
  %2223 = vmatpush1.msra.mxu0 0.0
  %2224 = vmatprep.subr.mxu0 0.0
  %2225 = vmatpush1.msra.mxu0 0.0
  %2226 = vmatprep.subr.mxu0 0.0
  %2227 = vmatpush1.msra.mxu0 0.0
  %2228 = vmatprep.subr.mxu0 0.0
  %2229 = vmatpush1.msra.mxu0 0.0
  %2230 = vmatprep.subr.mxu0 0.0
  %2231 = vmatpush1.msra.mxu0 0.0
  %2232 = vmatprep.subr.mxu0 0.0
  %2233 = vmatpush1.msra.mxu0 0.0
  %2234 = vmatprep.subr.mxu0 0.0
  %2235 = vmatpush1.msra.mxu0 0.0
  %2236 = vmatprep.subr.mxu0 0.0
  %2237 = vmatpush1.msra.mxu0 0.0
  %2238 = vmatprep.subr.mxu0 0.0
  %2239 = vmatpush1.msra.mxu0 0.0
  %2240 = vmatprep.subr.mxu0 0.0
  %2241 = vmatpush1.msra.mxu0 0.0
  %2242 = vmatprep.subr.mxu0 0.0
  %2243 = vmatpush1.msra.mxu0 0.0
  %2244 = vmatprep.subr.mxu0 0.0
  %2245 = vmatpush1.msra.mxu0 0.0
  %2246 = vmatprep.subr.mxu0 0.0
  %2247 = vmatpush1.msra.mxu0 0.0
  %2248 = vmatprep.subr.mxu0 0.0
  %2249 = vmatpush1.msra.mxu0 0.0
  %2250 = vmatprep.subr.mxu0 0.0
  %2251 = vmatpush1.msra.mxu0 0.0
  %2252 = vmatprep.subr.mxu0 0.0
  %2253 = vmatpush1.msra.mxu0 0.0
  %2254 = vmatprep.subr.mxu0 0.0
  %2255 = vmatpush1.msra.mxu0 0.0
  %2256 = vmatprep.subr.mxu0 0.0
  %2257 = vmatpush1.msra.mxu0 0.0
  %2258 = vmatprep.mubr.f32.mxu0 0.0
  %2259 = vmatmul.mubr.f32.gmra.mrb[0].mxu0 %v2192
  %v2260 = vpop.f32.mrb[0].mxu0
  %v2261 = vadd.f32 %v2187, %v2260
  %v2262 = vpop.f32.mrb[0].mxu0
  %2263 = vdwg.mxu0
  %v2264 = vmax.f32 %v2261, 0.0
  %v2265 = vlaneseq
  %v2266 = vshrl.u32 %v2265, 7
  %v2267 = vsub.s32 0, %v2266
  %v2268 = vrot.slane %v2182, %v2267
  %v2269 = vmul.f32 %v2264, %v2268
  %v2270 = vsel %vm1729, %v2269, 0.0
  %2271 = vadd.xlane.f32.xlu0 %v2270
  %v2272 = vpop.xlane.xlu0 %2271
  %v2273 = vlaneseq
  %v2274 = vshrl.u32 %v2273, 7
  %v2275 = vsub.s32 0, %v2274
  %v2276 = vrot.slane %v2183, %v2275
  %v2277 = vadd.f32 %v2272, %v2276
  %vm2278 = vcmask 1024
  %2279 = vst.msk [vmem:[%s3] sm:$0x3] %vm2278, %v2277
  // Predicated region
  $region14: #{net6_forward.1} parent=0 // pred_check
    _
  $region15: #{net6_forward.1} parent=0 // pred_check_branch
    %2281 = sbr.rel (0) target = $region17
  $region16: #{net6_forward.1} parent=0 // pred_region
    _
  $region17: #{net6_forward.1} parent=0 // pred_fallthru
    _
  // Predicated region
  $region18: #{net6_forward.1} parent=0 // pred_check
    _
  $region19: #{net6_forward.1} parent=0 // pred_check_branch
    %2283 = sbr.rel (0) target = $region21
  $region20: #{net6_forward.1} parent=0 // pred_region
    _
  $region21: #{net6_forward.1} parent=0 // pred_fallthru
    _

</llo_original>
